<compile_context>
chip_gen: v7x
topology: tpu7x:2x2x1
jax: 0.10.0
libtpu: 0.0.40
codegen_flags: <defaults>
</compile_context>

<pallas_src>
import numpy as np
import jax
import jax.numpy as jnp
from jax.experimental import pallas as pl
from jax.experimental.pallas import tpu as pltpu


# ----------------------------------------------------------------------------
# Generation-aware tiling / VMEM budget (v7x: 64 MiB VMEM, v5e/v6e: 128 MiB).
# ----------------------------------------------------------------------------
def _detect_tiles():
    vmem_cap = 128 * 1024 * 1024
    try:
        vmem_cap = int(pltpu.get_tpu_info().vmem_capacity_bytes)
    except Exception:
        pass
    if vmem_cap <= 64 * 1024 * 1024:            # v7x-class
        return 256, 40 * 1024 * 1024
    return 512, 80 * 1024 * 1024                # v5e / v6e


TM_MAX, VMEM_LIMIT = _detect_tiles()


def _round_up(n, m):
    return ((n + m - 1) // m) * m


def _tile_and_pad(n):
    """Row tile (multiple of 16 -> bf16-safe sublanes) and padded row count
    (multiple of the tile).  Single-tile blocks equal the full padded array."""
    n = max(int(n), 16)
    t = min(TM_MAX, _round_up(n, 16))
    return t, _round_up(n, t)


# ----------------------------------------------------------------------------
# Pallas kernels
# ----------------------------------------------------------------------------
def _make_mlp_kernel(n_in, norm, has_res):
    """Fused (implicit-concat) Linear -> SiLU -> Linear [-> LayerNorm] [+ res]."""

    def kernel(*refs):
        idx = 0
        x_refs = refs[idx:idx + n_in]; idx += n_in
        w1_refs = refs[idx:idx + n_in]; idx += n_in
        b1_ref = refs[idx]; idx += 1
        w2_ref = refs[idx]; idx += 1
        b2_ref = refs[idx]; idx += 1
        if norm:
            g_ref = refs[idx]; be_ref = refs[idx + 1]; idx += 2
        if has_res:
            res_ref = refs[idx]; idx += 1
        o_ref = refs[idx]

        # First Linear as a sum of partial matmuls (implicit concat of the
        # input slabs).  bf16 MXU inputs, f32 accumulation.
        acc = jnp.dot(x_refs[0][...].astype(jnp.bfloat16), w1_refs[0][...],
                      preferred_element_type=jnp.float32)
        for i in range(1, n_in):
            acc += jnp.dot(x_refs[i][...].astype(jnp.bfloat16), w1_refs[i][...],
                           preferred_element_type=jnp.float32)
        h = acc + b1_ref[...]
        # SiLU: reciprocal on the EUP (approx) instead of a VALU divide.
        h = h * pl.reciprocal(1.0 + jnp.exp(-h), approx=True)

        y = jnp.dot(h.astype(jnp.bfloat16), w2_ref[...],
                    preferred_element_type=jnp.float32) + b2_ref[...]

        if norm:                                 # LayerNorm, eps=1e-5 (f32)
            mean = jnp.mean(y, axis=-1, keepdims=True)
            cen = y - mean
            var = jnp.mean(cen * cen, axis=-1, keepdims=True)
            y = cen * jax.lax.rsqrt(var + 1e-5)
            y = y * g_ref[...] + be_ref[...]

        if has_res:                              # fused residual add (after norm,
            y = y + res_ref[...].astype(jnp.float32)   # matching the torch blocks)

        o_ref[...] = y.astype(o_ref.dtype)

    return kernel


def _scatter_kernel(off_ref, cnt_ref, dst_ref, e_ref, o_ref, acc_ref):
    """Segment-sorted scatter-sum: edges are pre-sorted by destination, each
    node tile only visits the edge blocks containing its segment.  The one-hot
    (tn x te) block is built in-kernel from a (tn,1) iota vs the (1,te) dst row
    and multiplied on the MXU; accumulation lives in a VMEM f32 scratch."""
    ni = pl.program_id(0)
    ei = pl.program_id(1)

    @pl.when(ei == 0)
    def _():
        acc_ref[...] = jnp.zeros_like(acc_ref)

    @pl.when(ei < cnt_ref[ni])
    def _():
        tn = acc_ref.shape[0]
        rows = jax.lax.broadcasted_iota(jnp.int32, (tn, 1), 0) + ni * tn
        onehot = (rows == dst_ref[...]).astype(jnp.bfloat16)   # exact 0/1 in bf16
        acc_ref[...] += jnp.dot(onehot, e_ref[...].astype(jnp.bfloat16),
                                preferred_element_type=jnp.float32)

    @pl.when(ei == pl.num_programs(1) - 1)
    def _():
        o_ref[...] = acc_ref[...].astype(o_ref.dtype)


# ----------------------------------------------------------------------------
# Pallas wrappers (inputs are already padded to their tile-multiple row counts)
# ----------------------------------------------------------------------------
def pallas_mlp(xs, p, residual=None, norm=True, out_dtype=jnp.bfloat16):
    """MeshGraphMLP with implicit concat of the input slabs and fused residual."""
    if not isinstance(xs, (list, tuple)):
        xs = [xs]
    npad = xs[0].shape[0]
    n_in = len(xs)
    hid = p["w1"][0].shape[1]
    dout = p["w2"].shape[1]
    tm = min(TM_MAX, npad)
    assert npad % tm == 0, (npad, tm)

    args = list(xs) + list(p["w1"]) + [p["b1"], p["w2"], p["b2"]]
    in_specs = ([pl.BlockSpec((tm, x.shape[1]), lambda i: (i, 0)) for x in xs]
                + [pl.BlockSpec((w.shape[0], hid), lambda i: (0, 0))
                   for w in p["w1"]]
                + [pl.BlockSpec((1, hid), lambda i: (0, 0)),
                   pl.BlockSpec((hid, dout), lambda i: (0, 0)),
                   pl.BlockSpec((1, dout), lambda i: (0, 0))])
    if norm:
        args += [p["gamma"], p["beta"]]
        in_specs += [pl.BlockSpec((1, dout), lambda i: (0, 0)),
                     pl.BlockSpec((1, dout), lambda i: (0, 0))]
    has_res = residual is not None
    if has_res:
        args.append(residual)
        in_specs.append(pl.BlockSpec((tm, dout), lambda i: (i, 0)))

    return pl.pallas_call(
        _make_mlp_kernel(n_in, norm, has_res),
        out_shape=jax.ShapeDtypeStruct((npad, dout), out_dtype),
        grid=(npad // tm,),
        in_specs=in_specs,
        out_specs=pl.BlockSpec((tm, dout), lambda i: (i, 0)),
        compiler_params=pltpu.CompilerParams(
            dimension_semantics=("parallel",),
            vmem_limit_bytes=VMEM_LIMIT),
    )(*args)


def pallas_scatter_sum(gs, ga, efeat, out_dtype=jnp.bfloat16):
    """Sum-aggregation of (dst-sorted) edge features onto destination nodes."""
    epad, h = efeat.shape
    assert epad == gs["epad"], (epad, gs["epad"])
    tn = gs["dst_tile"]
    npad = gs["dst_npad"]
    te = gs["e_tile"]
    n_e_blocks = gs["n_e_blocks"]
    max_blocks = gs["max_blocks"]

    def dst_map(ni, ei, off, cnt):
        return (0, jnp.minimum(off[ni] + ei, n_e_blocks - 1))

    def e_map(ni, ei, off, cnt):
        return (jnp.minimum(off[ni] + ei, n_e_blocks - 1), 0)

    return pl.pallas_call(
        _scatter_kernel,
        out_shape=jax.ShapeDtypeStruct((npad, h), out_dtype),
        grid_spec=pltpu.PrefetchScalarGridSpec(
            num_scalar_prefetch=2,
            grid=(npad // tn, max_blocks),
            in_specs=[pl.BlockSpec((1, te), dst_map),
                      pl.BlockSpec((te, h), e_map)],
            out_specs=pl.BlockSpec((tn, h), lambda ni, ei, off, cnt: (ni, 0)),
            scratch_shapes=[pltpu.VMEM((tn, h), jnp.float32)]),
        compiler_params=pltpu.CompilerParams(
            dimension_semantics=("parallel", "arbitrary"),
            vmem_limit_bytes=VMEM_LIMIT),
    )(ga["off"], ga["cnt"], ga["dst_row"], efeat)


# ----------------------------------------------------------------------------
# Static graph preparation (host side, done once): sort edges by destination,
# pad to the edge tile, build the per-node-tile edge-block schedule.
# ----------------------------------------------------------------------------
def prepare_graph(src, dst, n_dst_pad, dst_tile, edata=None):
    src = np.asarray(src, np.int32)
    dst = np.asarray(dst, np.int32)
    e = src.shape[0]
    e_tile, epad = _tile_and_pad(e)
    pad = epad - e

    order = np.argsort(dst, kind="stable")
    src_s = src[order]
    dst_s = dst[order]

    # Gather indices (padded edges point at node 0, harmless: their scatter dst
    # is an out-of-range sentinel so they never contribute to real nodes).
    src_g = np.concatenate([src_s, np.zeros(pad, np.int32)])
    dst_g = np.concatenate([dst_s, np.zeros(pad, np.int32)])
    dst_scatter = np.concatenate([dst_s, np.full(pad, n_dst_pad, np.int32)])

    n_node_tiles = n_dst_pad // dst_tile
    n_e_blocks = epad // e_tile
    starts = np.searchsorted(dst_scatter, np.arange(n_node_tiles) * dst_tile)
    ends = np.searchsorted(dst_scatter, np.arange(1, n_node_tiles + 1) * dst_tile)
    blk_start = starts // e_tile
    blk_end = -(-ends // e_tile)                      # ceil
    cnt = np.where(ends > starts,
                   np.maximum(blk_end - blk_start, 0), 0).astype(np.int32)
    off = np.minimum(blk_start, n_e_blocks - 1).astype(np.int32)
    max_blocks = max(int(cnt.max()) if cnt.size else 0, 1)

    gs = {"e": e, "epad": epad, "e_tile": e_tile,
          "dst_npad": int(n_dst_pad), "dst_tile": int(dst_tile),
          "n_e_blocks": int(n_e_blocks), "max_blocks": int(max_blocks)}
    ga = {"src_g": jnp.asarray(src_g),
          "dst_g": jnp.asarray(dst_g),
          "dst_row": jnp.asarray(dst_scatter.reshape(1, epad)),
          "off": jnp.asarray(off),
          "cnt": jnp.asarray(cnt)}
    if edata is not None:
        ef = np.asarray(edata, np.float32)[order]
        ga["edata"] = jnp.asarray(np.pad(ef, ((0, pad), (0, 0))))
    return gs, ga


# ----------------------------------------------------------------------------
# Parameter init (deterministic, synthetic); w1 stored as slabs per input.
# ----------------------------------------------------------------------------
def init_mlp(key, dins, dh, dout, norm=True):
    if not isinstance(dins, (list, tuple)):
        dins = [dins]
    keys = jax.random.split(key, len(dins) + 1)
    din_total = sum(dins)
    w1 = [(jax.random.normal(keys[i], (d, dh), jnp.float32)
           * (1.0 / jnp.sqrt(din_total))).astype(jnp.bfloat16)
          for i, d in enumerate(dins)]
    p = {
        "w1": w1,
        "b1": jnp.zeros((1, dh), jnp.float32),
        "w2": (jax.random.normal(keys[-1], (dh, dout), jnp.float32)
               * (1.0 / jnp.sqrt(dh))).astype(jnp.bfloat16),
        "b2": jnp.zeros((1, dout), jnp.float32),
    }
    if norm:
        p["gamma"] = jnp.ones((1, dout), jnp.float32)
        p["beta"] = jnp.zeros((1, dout), jnp.float32)
    return p


def init_graphcast_params(key, in_grid, in_mesh, in_edge, out_grid, hidden,
                          processor_layers=4):
    keys = iter(jax.random.split(key, 64))

    def mlp(dins, dout, norm=True):
        return init_mlp(next(keys), dins, hidden, dout, norm)

    params = {
        # GraphCastEncoderEmbedder
        "emb_grid": mlp(in_grid, hidden),
        "emb_mesh": mlp(in_mesh, hidden),
        "emb_g2m": mlp(in_edge, hidden),
        "emb_mesh_e": mlp(in_edge, hidden),
        # MeshGraphEncoder (grid2mesh)
        "enc_edge": mlp([hidden, hidden, hidden], hidden),
        "enc_src": mlp([hidden], hidden),
        "enc_dst": mlp([hidden, hidden], hidden),
        # processor_encoder (1) + processor (L-2) + processor_decoder (1)
        "processor": [
            {"edge": mlp([hidden, hidden, hidden], hidden),
             "node": mlp([hidden, hidden], hidden)}
            for _ in range(processor_layers)
        ],
        # GraphCastDecoderEmbedder
        "emb_m2g": mlp(in_edge, hidden),
        # MeshGraphDecoder (mesh2grid)
        "dec_edge": mlp([hidden, hidden, hidden], hidden),
        "dec_node": mlp([hidden, hidden], hidden),
        # finale (no norm) — output padded to 128 lanes for lane-dense stores
        "finale": mlp([hidden], out_grid, norm=False),
    }
    dpad = _round_up(out_grid, 128)
    params["finale"]["w2"] = jnp.pad(params["finale"]["w2"],
                                     ((0, 0), (0, dpad - out_grid)))
    params["finale"]["b2"] = jnp.pad(params["finale"]["b2"],
                                     ((0, 0), (0, dpad - out_grid)))
    return params


# ----------------------------------------------------------------------------
# GraphCastNet forward (static graph schedule closed over; arrays are jit args)
# ----------------------------------------------------------------------------
def build_graphcast_forward(gs_g2m, gs_mesh, gs_m2g, out_dim, n_grid):

    def fwd(params, grid_nfeat_p, mesh_ndata_p, ga_g2m, ga_mesh, ga_m2g):
        # ---- encoder embedder ----------------------------------------------
        grid_emb = pallas_mlp(grid_nfeat_p, params["emb_grid"])
        mesh_emb = pallas_mlp(mesh_ndata_p, params["emb_mesh"])
        g2m_emb = pallas_mlp(ga_g2m["edata"], params["emb_g2m"])
        mesh_e_emb = pallas_mlp(ga_mesh["edata"], params["emb_mesh_e"])

        # ---- MeshGraphEncoder (grid -> mesh) --------------------------------
        # TODO(synk): fuse these jnp.take gathers into the MLP kernel (manual
        #             DMA gather via scalar-prefetched indices).
        efeat = pallas_mlp(
            [g2m_emb,
             jnp.take(grid_emb, ga_g2m["src_g"], axis=0),
             jnp.take(mesh_emb, ga_g2m["dst_g"], axis=0)],
            params["enc_edge"])
        agg = pallas_scatter_sum(gs_g2m, ga_g2m, efeat)
        mesh_nfeat = pallas_mlp([agg, mesh_emb], params["enc_dst"],
                                residual=mesh_emb)
        grid_enc = pallas_mlp(grid_emb, params["enc_src"], residual=grid_emb)

        # ---- processor_encoder + processor + processor_decoder --------------
        efeat_m, nfeat_m = mesh_e_emb, mesh_nfeat
        for layer in params["processor"]:
            efeat_m = pallas_mlp(
                [efeat_m,
                 jnp.take(nfeat_m, ga_mesh["src_g"], axis=0),
                 jnp.take(nfeat_m, ga_mesh["dst_g"], axis=0)],
                layer["edge"], residual=efeat_m)
            agg = pallas_scatter_sum(gs_mesh, ga_mesh, efeat_m)
            nfeat_m = pallas_mlp([agg, nfeat_m], layer["node"],
                                 residual=nfeat_m)

        # ---- decoder embedder + MeshGraphDecoder (mesh -> grid) --------------
        m2g_emb = pallas_mlp(ga_m2g["edata"], params["emb_m2g"])
        efeat = pallas_mlp(
            [m2g_emb,
             jnp.take(nfeat_m, ga_m2g["src_g"], axis=0),
             jnp.take(grid_enc, ga_m2g["dst_g"], axis=0)],
            params["dec_edge"])
        agg = pallas_scatter_sum(gs_m2g, ga_m2g, efeat)
        grid_dec = pallas_mlp([agg, grid_enc], params["dec_node"],
                              residual=grid_enc)

        # ---- finale (no norm, lane-dense padded output) ----------------------
        out = pallas_mlp(grid_dec, params["finale"], norm=False,
                         out_dtype=jnp.float32)
        return out[:n_grid, :out_dim]          # single slice at the very end

    return jax.jit(fwd)


# ----------------------------------------------------------------------------
if __name__ == "__main__":
    # small synthetic graph, consistent with the module's interface
    in_grid, in_mesh, in_edge, out_grid = 10, 3, 4, 1
    hidden = 128
    processor_layers = 4
    n_grid, n_mesh = 600, 200
    e_g2m, e_mesh, e_m2g = 900, 800, 900

    key = jax.random.PRNGKey(0)
    keys = jax.random.split(key, 16)

    grid_nfeat = jax.random.normal(keys[0], (n_grid, in_grid), jnp.float32)
    mesh_ndata = jax.random.normal(keys[1], (n_mesh, in_mesh), jnp.float32)
    mesh_edata = jax.random.normal(keys[2], (e_mesh, in_edge), jnp.float32)
    g2m_edata = jax.random.normal(keys[3], (e_g2m, in_edge), jnp.float32)
    m2g_edata = jax.random.normal(keys[4], (e_m2g, in_edge), jnp.float32)

    g2m_src = np.asarray(jax.random.randint(keys[5], (e_g2m,), 0, n_grid))
    g2m_dst = np.asarray(jax.random.randint(keys[6], (e_g2m,), 0, n_mesh))
    mesh_src = np.asarray(jax.random.randint(keys[7], (e_mesh,), 0, n_mesh))
    mesh_dst = np.asarray(jax.random.randint(keys[8], (e_mesh,), 0, n_mesh))
    m2g_src = np.asarray(jax.random.randint(keys[9], (e_m2g,), 0, n_mesh))
    m2g_dst = np.asarray(jax.random.randint(keys[10], (e_m2g,), 0, n_grid))

    # ---- pad node features once; build static edge schedules ----------------
    grid_tile, n_grid_pad = _tile_and_pad(n_grid)
    mesh_tile, n_mesh_pad = _tile_and_pad(n_mesh)
    grid_nfeat_p = jnp.pad(grid_nfeat, ((0, n_grid_pad - n_grid), (0, 0)))
    mesh_ndata_p = jnp.pad(mesh_ndata, ((0, n_mesh_pad - n_mesh), (0, 0)))

    gs_g2m, ga_g2m = prepare_graph(g2m_src, g2m_dst, n_mesh_pad, mesh_tile,
                                   np.asarray(g2m_edata))
    gs_mesh, ga_mesh = prepare_graph(mesh_src, mesh_dst, n_mesh_pad, mesh_tile,
                                     np.asarray(mesh_edata))
    gs_m2g, ga_m2g = prepare_graph(m2g_src, m2g_dst, n_grid_pad, grid_tile,
                                   np.asarray(m2g_edata))

    # ---- sanity-check the segment-sorted scatter against segment_sum --------
    ef_test = jax.random.normal(
        keys[12], (gs_mesh["epad"], hidden), jnp.float32).astype(jnp.bfloat16)
    agg_pl = jax.block_until_ready(pallas_scatter_sum(gs_mesh, ga_mesh, ef_test))
    seg_ids = ga_mesh["dst_row"].reshape(-1)
    agg_ref = jax.ops.segment_sum(ef_test.astype(jnp.float32), seg_ids,
                                  num_segments=gs_mesh["dst_npad"] + 1)
    np.testing.assert_allclose(np.asarray(agg_pl, np.float32),
                               np.asarray(agg_ref)[:gs_mesh["dst_npad"]],
                               rtol=2e-2, atol=2e-2)

    # ---- full forward --------------------------------------------------------
    params = init_graphcast_params(keys[11], in_grid, in_mesh, in_edge,
                                   out_grid, hidden, processor_layers)
    fwd = build_graphcast_forward(gs_g2m, gs_mesh, gs_m2g, out_grid, n_grid)
    out = fwd(params, grid_nfeat_p, mesh_ndata_p, ga_g2m, ga_mesh, ga_m2g)
    out = jax.block_until_ready(out)

    assert out.shape == (n_grid, out_grid), out.shape
    assert bool(jnp.all(jnp.isfinite(out)))
    print("KERNEL_OK")
</pallas_src>

<mosaic_0001>
module attributes {stable_mosaic.version = 11 : i64} {
  func.func @_scatter_kernel(%arg0: i32, %arg1: i32, %arg2: memref<1xi32, #tpu.memory_space<smem>>, %arg3: memref<1xi32, #tpu.memory_space<smem>>, %arg4: memref<1x512xi32, #tpu.memory_space<vmem>>, %arg5: memref<512x128xbf16, #tpu.memory_space<vmem>>, %arg6: memref<208x128xbf16, #tpu.memory_space<vmem>>, %arg7: memref<208x128xf32, #tpu.memory_space<vmem>>) attributes {dimension_semantics = [#tpu.dimension_semantics<parallel>, #tpu.dimension_semantics<arbitrary>], iteration_bounds = array<i64: 1, 2>, scalar_prefetch = 2 : i64, scratch_operands = 1 : i64, tpu.core_type = #tpu.core_type<tc>, window_params = [{transform_indices = @transform_0, window_bounds = array<i64: 1, 512>}, {transform_indices = @transform_1, window_bounds = array<i64: 512, 128>}, {transform_indices = @transform_2, window_bounds = array<i64: 208, 128>}]} {
    %c0_i32 = arith.constant 0 : i32
    %0 = arith.cmpi eq, %arg1, %c0_i32 : i32
    %1 = arith.extui %0 : i1 to i32
    %c0_i32_0 = arith.constant 0 : i32
    %2 = arith.cmpi ne, %1, %c0_i32_0 : i32
    scf.if %2 {
      %cst = arith.constant 0.000000e+00 : f32
      %11 = vector.broadcast %cst : f32 to vector<208x128xf32>
      %c0 = arith.constant 0 : index
      %c0_3 = arith.constant 0 : index
      %12 = vector.load %arg7[%c0, %c0_3] : memref<208x128xf32, #tpu.memory_space<vmem>>, vector<208x128xf32>
      tpu.vector_store %arg7[%c0, %c0_3], %11 {strides = array<i32>} : memref<208x128xf32, #tpu.memory_space<vmem>>, vector<208x128xf32>,
    } else {
    }
    %3 = arith.index_cast %arg0 : i32 to index
    %4 = memref.load %arg3[%3] : memref<1xi32, #tpu.memory_space<smem>>
    %5 = arith.cmpi slt, %arg1, %4 : i32
    %6 = arith.extui %5 : i1 to i32
    %c0_i32_1 = arith.constant 0 : i32
    %7 = arith.cmpi ne, %6, %c0_i32_1 : i32
    scf.if %7 {
      %11 = tpu.iota {dimensions = array<i32: 0>} : vector<208x1xi32>
      %c208_i32 = arith.constant 208 : i32
      %12 = arith.muli %arg0, %c208_i32 : i32
      %13 = vector.broadcast %12 : i32 to vector<208x1xi32>
      %14 = arith.addi %11, %13 : vector<208x1xi32>
      %c0 = arith.constant 0 : index
      %c0_3 = arith.constant 0 : index
      %15 = vector.load %arg4[%c0, %c0_3] : memref<1x512xi32, #tpu.memory_space<vmem>>, vector<1x512xi32>
      %16 = vector.broadcast %14 : vector<208x1xi32> to vector<208x512xi32>
      %17 = vector.broadcast %15 : vector<1x512xi32> to vector<208x512xi32>
      %18 = arith.cmpi eq, %16, %17 : vector<208x512xi32>
      %19 = arith.extui %18 : vector<208x512xi1> to vector<208x512xi32>
      %20 = arith.sitofp %19 : vector<208x512xi32> to vector<208x512xf32>
      %21 = arith.truncf %20 : vector<208x512xf32> to vector<208x512xbf16>
      %c0_4 = arith.constant 0 : index
      %c0_5 = arith.constant 0 : index
      %22 = vector.load %arg7[%c0_4, %c0_5] : memref<208x128xf32, #tpu.memory_space<vmem>>, vector<208x128xf32>
      %c0_6 = arith.constant 0 : index
      %c0_7 = arith.constant 0 : index
      %23 = vector.load %arg5[%c0_6, %c0_7] : memref<512x128xbf16, #tpu.memory_space<vmem>>, vector<512x128xbf16>
      %cst = arith.constant dense<0.000000e+00> : vector<208x128xf32>
      %24 = tpu.matmul %21, %23, %cst {dimension_numbers = #tpu.dot_dimension_numbers<[1], [0], [0], [1], [0, 0, 1, 1], [], []>} : vector<208x512xbf16>, vector<512x128xbf16>, vector<208x128xf32> -> vector<208x128xf32>
      %25 = arith.addf %22, %24 : vector<208x128xf32>
      %c0_8 = arith.constant 0 : index
      %c0_9 = arith.constant 0 : index
      %26 = vector.load %arg7[%c0_8, %c0_9] : memref<208x128xf32, #tpu.memory_space<vmem>>, vector<208x128xf32>
      tpu.vector_store %arg7[%c0_8, %c0_9], %25 {strides = array<i32>} : memref<208x128xf32, #tpu.memory_space<vmem>>, vector<208x128xf32>,
    } else {
    }
    %c1_i32 = arith.constant 1 : i32
    %8 = arith.cmpi eq, %arg1, %c1_i32 : i32
    %9 = arith.extui %8 : i1 to i32
    %c0_i32_2 = arith.constant 0 : i32
    %10 = arith.cmpi ne, %9, %c0_i32_2 : i32
    scf.if %10 {
      %c0 = arith.constant 0 : index
      %c0_3 = arith.constant 0 : index
      %11 = vector.load %arg7[%c0, %c0_3] : memref<208x128xf32, #tpu.memory_space<vmem>>, vector<208x128xf32>
      %12 = arith.truncf %11 : vector<208x128xf32> to vector<208x128xbf16>
      %c0_4 = arith.constant 0 : index
      %c0_5 = arith.constant 0 : index
      %13 = vector.load %arg6[%c0_4, %c0_5] : memref<208x128xbf16, #tpu.memory_space<vmem>>, vector<208x128xbf16>
      tpu.vector_store %arg6[%c0_4, %c0_5], %12 {strides = array<i32>} : memref<208x128xbf16, #tpu.memory_space<vmem>>, vector<208x128xbf16>,
    } else {
    }
    return
  }
  func.func @transform_0(%arg0: i32, %arg1: i32, %arg2: memref<1xi32, #tpu.memory_space<smem>>, %arg3: memref<1xi32, #tpu.memory_space<smem>>) -> (i32, i32) {
    %0 = arith.index_cast %arg0 : i32 to index
    %1 = memref.load %arg2[%0] : memref<1xi32, #tpu.memory_space<smem>>
    %2 = arith.addi %1, %arg1 : i32
    %c1_i32 = arith.constant 1 : i32
    %3 = arith.minsi %2, %c1_i32 : i32
    %c0_i32 = arith.constant 0 : i32
    %c0_i32_0 = arith.constant 0 : i32
    return %c0_i32, %3 : i32, i32
  }
  func.func @transform_1(%arg0: i32, %arg1: i32, %arg2: memref<1xi32, #tpu.memory_space<smem>>, %arg3: memref<1xi32, #tpu.memory_space<smem>>) -> (i32, i32) {
    %0 = arith.index_cast %arg0 : i32 to index
    %1 = memref.load %arg2[%0] : memref<1xi32, #tpu.memory_space<smem>>
    %2 = arith.addi %1, %arg1 : i32
    %c1_i32 = arith.constant 1 : i32
    %3 = arith.minsi %2, %c1_i32 : i32
    %c0_i32 = arith.constant 0 : i32
    %c0_i32_0 = arith.constant 0 : i32
    return %3, %c0_i32 : i32, i32
  }
  func.func @transform_2(%arg0: i32, %arg1: i32, %arg2: memref<1xi32, #tpu.memory_space<smem>>, %arg3: memref<1xi32, #tpu.memory_space<smem>>) -> (i32, i32) {
    %c0_i32 = arith.constant 0 : i32
    %c0_i32_0 = arith.constant 0 : i32
    return %arg0, %c0_i32 : i32, i32
  }
}

</mosaic_0001>

<llo_original>
// kernel: tpu_custom_call.1
$region0: #{tpu_custom_call.1}
  #allocation0 [shape = 'u32[]', space=smem, size = 0x4, offset = 0x4, fixed_abs, tag = 'smem constant byte address 0x4 - core index']
  #allocation1 [shape = 'u32[144,128]{1,0:T(1,128)}', space=vmem, size = 0x12000, scoped, tag = 'internal scratch']
  #allocation2 [shape = 'f32[208,128]{1,0:T(8,128)}', space=vmem, size = 0x1a000, scoped, tag = 'scratch operand']
  #allocation3 [shape = 's32[1]{0}', space=sflag, size = 0x4, scoped, tag = 'scoped memory for tpu_custom_call.1']
  #allocation4 [shape = 's32[1]{0:T(128)S(6)}', space=smem, size = 0x200, scoped, tag = 'prefetched SMEM operand 0']
  #allocation5 [shape = 's32[1]{0:T(128)S(6)}', space=smem, size = 0x200, scoped, tag = 'prefetched SMEM operand 1']
  %s0 = inlined_call_operand.<no memory space> [shape: s32[1], index: 0, kind: input, shape index: {}]
  %s1 = inlined_call_operand.<no memory space> [shape: s32[1], index: 1, kind: input, shape index: {}]
  %s2 = inlined_call_operand.hbm [shape: s32[1,1024], index: 2, kind: input, shape index: {}]
  %s3 = inlined_call_operand.hbm [shape: bf16[1024,128], index: 3, kind: input, shape index: {}]
  %s4 = inlined_call_operand.hbm [shape: bf16[208,128], index: 4, kind: output, shape index: {}]
  %s5 = sld [smem:[#allocation0]]
  $region61: #{tpu_custom_call.1} parent=0
    _
  %s7 = ssub.s32 1, %s5
  %s8 = scalar_select 0, %s7, %s5
  %9 = sst [smem:[#allocation4]] %s0
  %10 = sst [smem:[#allocation5]] %s1
  $region1: #{tpu_custom_call.1} parent=0
    #allocation6 [shape = 'u8[4096]{0}', space=vmem, size = 0x1000, scoped, tag = 'input window, operand 2']
    #allocation7 [shape = 's32[2]{0}', space=sflag, size = 0x8, scoped, tag = 'scoped memory for tpu_custom_call.1']
    #allocation8 [shape = 's32[2]{0}', space=sflag, size = 0x8, scoped, tag = 'scoped memory for tpu_custom_call.1']
    #allocation9 [shape = 'u8[262144]{0}', space=vmem, size = 0x40000, scoped, tag = 'input window, operand 3']
    #allocation10 [shape = 's32[2]{0}', space=sflag, size = 0x8, scoped, tag = 'scoped memory for tpu_custom_call.1']
    #allocation11 [shape = 'u8[53248]{0}', space=vmem, size = 0xd000, scoped, tag = 'output window, operand 0, single buffered']
    %11 = vsyncpa [#allocation7], 0
    %s12 = scalar_lea.sflag [#allocation7], 1
    %13 = vsyncpa %s12, 0
    %14 = vsyncpa [#allocation10], 0
    %s15 = scalar_lea.sflag [#allocation10], 1
    %16 = vsyncpa %s15, 0
    %17 = vsyncpa [#allocation8], 0
    loop: start=0, step=1, limit=4
    $region2: #{tpu_custom_call.1} parent=1 // loop_pre_header
      _
    $region3: #{tpu_custom_call.1} parent=1 // loop_header
      %s19 = sphi 0, %s23
      %p20 = scmp.ge.s32.totalorder %s19, 4
      %s26 = sphi 0, %s38
      %s27 = sphi 0, %s34
      %s28 = sphi 0, %s26
      %s29 = sphi 0, %s27
      %s30 = sphi 0, %s28
      %s31 = sphi 0, %s29
      %s49 = sphi 0, %s51
      %s52 = sphi 0, %s49
      %s53 = sphi 0, %s52
      %s69 = sphi 0, %s53
      %s83 = sphi 0, %s85
      %s86 = sphi 0, %s83
      %s87 = sphi 0, %s86
      %s103 = sphi 0, %s87
      %s109 = sphi 0, %s111
      %s112 = sphi 0, %s109
      %s113 = sphi 0, %s112
      %s129 = sphi 0, %s113
    $region4: #{tpu_custom_call.1} parent=1 // loop_header_branch
      %22 = sbr.rel (%p20) target = $region8
    $region5: #{tpu_custom_call.1} parent=1 // loop_body
      %s24 = ssub.s32 %s19, 1
      %s25 = ssub.s32 %s19, 2
      %s32 = sadd.s32 1, %s27
      %p33 = scmp.ge.s32.totalorder %s32, 2
      %s34 = scalar_select %p33, 0, %s32
      %s35 = sadd.s32 1, %s26
      %s36 = scalar_select %p33, %s35, %s26
      %p37 = scmp.ge.s32.totalorder %s36, 1
      %s38 = scalar_select %p37, 0, %s36
      %s39 = sld [smem:[#allocation4 + %s26]]
      %s40 = sadd.s32 %s39, %s27
      %p41 = scmp.lt.s32.totalorder %s40, 1
      %s42 = scalar_select %p41, %s40, 1
      %s43 = sld [smem:[#allocation4 + %s38]]
      %s44 = sadd.s32 %s43, %s34
      %p45 = scmp.lt.s32.totalorder %s44, 1
      %s46 = scalar_select %p45, %s44, 1
      %s47 = ssub.s32 %s42, %s46
      %p48 = scmp.eq.s32.totalorder %s47, 0
      %s50 = sadd.s32 %s49, 1
      %s51 = scalar_select %p48, %s49, %s50
      %p54 = pneg %p48
      %p55 = scmp.eq.s32.totalorder %s19, 1
      %p56 = por %p54, %p55
      %p57 = scmp.ne.s32.totalorder %s49, %s52
      %p58 = scmp.eq.s32.totalorder %s19, 0
      %p59 = por %p57, %p58
      %p60 = scmp.ne.s32.totalorder %s49, %s52
      %p61 = scmp.eq.s32.totalorder %s24, 1
      %p62 = por %p60, %p61
      %p63 = scmp.ne.s32.totalorder %s52, %s53
      %p64 = scmp.eq.s32.totalorder %s24, 0
      %p65 = por %p63, %p64
      %p66 = scmp.ne.s32.totalorder %s52, %s53
      %p67 = scmp.eq.s32.totalorder %s25, 1
      %p68 = por %p66, %p67
      %p70 = scmp.ne.s32.totalorder %s53, %s69
      %p71 = scmp.eq.s32.totalorder %s25, 0
      %p72 = por %p70, %p71
      %s73 = sld [smem:[#allocation4 + %s26]]
      %s74 = sadd.s32 %s73, %s27
      %p75 = scmp.lt.s32.totalorder %s74, 1
      %s76 = scalar_select %p75, %s74, 1
      %s77 = sld [smem:[#allocation4 + %s38]]
      %s78 = sadd.s32 %s77, %s34
      %p79 = scmp.lt.s32.totalorder %s78, 1
      %s80 = scalar_select %p79, %s78, 1
      %s81 = ssub.s32 %s76, %s80
      %p82 = scmp.eq.s32.totalorder %s81, 0
      %s84 = sadd.s32 %s83, 1
      %s85 = scalar_select %p82, %s83, %s84
      %p88 = pneg %p82
      %p89 = scmp.eq.s32.totalorder %s19, 1
      %p90 = por %p88, %p89
      %p91 = scmp.ne.s32.totalorder %s83, %s86
      %p92 = scmp.eq.s32.totalorder %s19, 0
      %p93 = por %p91, %p92
      %p94 = scmp.ne.s32.totalorder %s83, %s86
      %p95 = scmp.eq.s32.totalorder %s24, 1
      %p96 = por %p94, %p95
      %p97 = scmp.ne.s32.totalorder %s86, %s87
      %p98 = scmp.eq.s32.totalorder %s24, 0
      %p99 = por %p97, %p98
      %p100 = scmp.ne.s32.totalorder %s86, %s87
      %p101 = scmp.eq.s32.totalorder %s25, 1
      %p102 = por %p100, %p101
      %p104 = scmp.ne.s32.totalorder %s87, %s103
      %p105 = scmp.eq.s32.totalorder %s25, 0
      %p106 = por %p104, %p105
      %s107 = ssub.s32 %s26, %s38
      %p108 = scmp.eq.s32.totalorder %s107, 0
      %s110 = sadd.s32 %s109, 1
      %s111 = scalar_select %p108, %s109, %s110
      %p114 = pneg %p108
      %p115 = scmp.eq.s32.totalorder %s19, 1
      %p116 = por %p114, %p115
      %p117 = scmp.ne.s32.totalorder %s109, %s112
      %p118 = scmp.eq.s32.totalorder %s19, 0
      %p119 = por %p117, %p118
      %p120 = scmp.ne.s32.totalorder %s109, %s112
      %p121 = scmp.eq.s32.totalorder %s24, 1
      %p122 = por %p120, %p121
      %p123 = scmp.ne.s32.totalorder %s112, %s113
      %p124 = scmp.eq.s32.totalorder %s24, 0
      %p125 = por %p123, %p124
      %p126 = scmp.ne.s32.totalorder %s112, %s113
      %p127 = scmp.eq.s32.totalorder %s25, 1
      %p128 = por %p126, %p127
      %p130 = scmp.ne.s32.totalorder %s113, %s129
      %p131 = scmp.eq.s32.totalorder %s25, 0
      %p132 = por %p130, %p131
      %p133 = scmp.le.s32.totalorder 1, %s19
      %p134 = scmp.lt.s32.totalorder %s19, 3
      %p135 = pnand %p133, %p134
      %p136 = pneg %p135
      // Predicated region
      $region9: #{tpu_custom_call.1} parent=5 // pred_check
        _
      $region10: #{tpu_custom_call.1} parent=5 // pred_check_branch
        %138 = sbr.rel (%p135) target = $region12
      $region11: #{tpu_custom_call.1} parent=5 // pred_region
        %s139 = ssub.s32 %s19, 1
      $region12: #{tpu_custom_call.1} parent=5 // pred_fallthru
        _
      %p140 = scmp.lt.s32.totalorder %s19, 2
      // Predicated region
      $region13: #{tpu_custom_call.1} parent=5 // pred_check
        %p141 = pneg %p140
      $region14: #{tpu_custom_call.1} parent=5 // pred_check_branch
        %143 = sbr.rel (%p141) target = $region16
      $region15: #{tpu_custom_call.1} parent=5 // pred_region
        // Predicated region
        $region17: #{tpu_custom_call.1} parent=15 // pred_check
          %p144 = pneg %p59
        $region18: #{tpu_custom_call.1} parent=15 // pred_check_branch
          %146 = sbr.rel (%p144) target = $region20
        $region19: #{tpu_custom_call.1} parent=15 // pred_region
          %s147 = sand.u32 %s49, 1
          %s148 = scalar_lea.sflag [#allocation7], %s147
          %s149 = sand.u32 %s49, 1
          %s150 = smul.addr %s149, 4
          %s151 = scalar_lea.vmem [#allocation6], %s150
          %s152 = sld [smem:[#allocation4 + %s26]]
          %s153 = sadd.s32 %s152, %s27
          %p154 = scmp.lt.s32.totalorder %s153, 1
          %s155 = scalar_select %p154, %s153, 1
          %s156 = smul.u32 4, %s155
          %s158 = ssub.s32 64, 64
          %159 = vsyncadd %s148, %s158
          %s160 = smul.addr %s156, 16
          %s161 = scalar_lea.hbm %s2, %s160
          %s163 = sshll.u32 %s151, 4
          %s164 = int_to_ptr.vmem [resolvable:$true] %s163
          %166 = dma.hbm_to_vmem [thread:$0]  %s161, 64, %s164, %s148
        $region20: #{tpu_custom_call.1} parent=15 // pred_fallthru
          _
        // Predicated region
        $region21: #{tpu_custom_call.1} parent=15 // pred_check
          %p167 = pneg %p93
        $region22: #{tpu_custom_call.1} parent=15 // pred_check_branch
          %169 = sbr.rel (%p167) target = $region24
        $region23: #{tpu_custom_call.1} parent=15 // pred_region
          %s170 = sand.u32 %s83, 1
          %s171 = scalar_lea.sflag [#allocation10], %s170
          %s172 = sand.u32 %s83, 1
          %s173 = smul.addr %s172, 256
          %s174 = scalar_lea.vmem [#allocation9], %s173
          %s175 = sld [smem:[#allocation4 + %s26]]
          %s176 = sadd.s32 %s175, %s27
          %p177 = scmp.lt.s32.totalorder %s176, 1
          %s178 = scalar_select %p177, %s176, 1
          %s179 = smul.u32 64, %s178
          %s181 = ssub.s32 4096, 4096
          %182 = vsyncadd %s171, %s181
          %s183 = smul.addr %s179, 64
          %s184 = scalar_lea.hbm %s3, %s183
          %s185 = sshll.u32 %s174, 4
          %s186 = int_to_ptr.vmem [resolvable:$true] %s185
          %191 = dma.hbm_to_vmem [thread:$0]  %s184, 4096, %s186, %s171, 64, 64, 4
        $region24: #{tpu_custom_call.1} parent=15 // pred_fallthru
          _
      $region16: #{tpu_custom_call.1} parent=5 // pred_fallthru
        _
      %p192 = scmp.le.s32.totalorder 1, %s19
      %p193 = scmp.lt.s32.totalorder %s19, 3
      %p194 = pnand %p192, %p193
      %p195 = pneg %p194
      // Predicated region
      $region25: #{tpu_custom_call.1} parent=5 // pred_check
        _
      $region26: #{tpu_custom_call.1} parent=5 // pred_check_branch
        %197 = sbr.rel (%p194) target = $region28
      $region27: #{tpu_custom_call.1} parent=5 // pred_region
        %s198 = ssub.s32 %s19, 1
        %s199 = sand.u32 %s52, 1
        %s200 = scalar_lea.sflag [#allocation7], %s199
        %s201 = sand.u32 %s52, 1
        %s202 = smul.addr %s201, 4
        %s203 = scalar_lea.vmem [#allocation6], %s202
        // Predicated region
        $region29: #{tpu_custom_call.1} parent=27 // pred_check
          %p204 = pneg %p65
        $region30: #{tpu_custom_call.1} parent=27 // pred_check_branch
          %206 = sbr.rel (%p204) target = $region32
        $region31: #{tpu_custom_call.1} parent=27 // pred_region
          %207 = dma.done %s200, 64
        $region32: #{tpu_custom_call.1} parent=27 // pred_fallthru
          _
        %s208 = sand.u32 %s86, 1
        %s209 = scalar_lea.sflag [#allocation10], %s208
        %s210 = sand.u32 %s86, 1
        %s211 = smul.addr %s210, 256
        %s212 = scalar_lea.vmem [#allocation9], %s211
        // Predicated region
        $region33: #{tpu_custom_call.1} parent=27 // pred_check
          %p213 = pneg %p99
        $region34: #{tpu_custom_call.1} parent=27 // pred_check_branch
          %215 = sbr.rel (%p213) target = $region36
        $region35: #{tpu_custom_call.1} parent=27 // pred_region
          %216 = dma.done %s209, 4096
        $region36: #{tpu_custom_call.1} parent=27 // pred_fallthru
          _
        %s217 = sand.u32 %s52, 1
        %s218 = scalar_lea.sflag [#allocation7], %s217
        %s219 = sand.u32 %s52, 1
        %s220 = smul.addr %s219, 4
        %s221 = scalar_lea.vmem [#allocation6], %s220
        %p222 = pneg %p65
        %p223 = pneg %p62
        %s224 = sand.u32 %s86, 1
        %s225 = scalar_lea.sflag [#allocation10], %s224
        %s226 = sand.u32 %s86, 1
        %s227 = smul.addr %s226, 256
        %s228 = scalar_lea.vmem [#allocation9], %s227
        %p229 = pneg %p99
        %p230 = pneg %p96
        %p231 = pneg %p125
        %p232 = pneg %p122
        %s233 = sld [smem:[#allocation4 + %s28]]
        %s234 = sadd.s32 %s233, %s29
        %p235 = scmp.lt.s32.totalorder %s234, 1
        %s236 = scalar_select %p235, %s234, 1
        %s237 = smul.u32 4, %s236
        %s238 = sld [smem:[#allocation4 + %s28]]
        %s239 = sadd.s32 %s238, %s29
        %p240 = scmp.lt.s32.totalorder %s239, 1
        %s241 = scalar_select %p240, %s239, 1
        %s242 = smul.u32 64, %s241
        %s243 = smul.u32 26, %s28
        %p245 = scmp.eq.s32.totalorder %s29, 0
        // Predicated region
        $region37: #{tpu_custom_call.1} parent=27 // pred_check
          %p246 = pneg %p245
        $region38: #{tpu_custom_call.1} parent=27 // pred_check_branch
          %248 = sbr.rel (%p246) target = $region40
        $region39: #{tpu_custom_call.1} parent=27 // pred_region
          %249 = vst [vmem:[#allocation2] sm:$0xff] 0.0
          %250 = vst [vmem:[#allocation2 + $0x8] sm:$0xff] 0.0
          %251 = vst [vmem:[#allocation2 + $0x10] sm:$0xff] 0.0
          %252 = vst [vmem:[#allocation2 + $0x18] sm:$0xff] 0.0
          %253 = vst [vmem:[#allocation2 + $0x20] sm:$0xff] 0.0
          %254 = vst [vmem:[#allocation2 + $0x28] sm:$0xff] 0.0
          %255 = vst [vmem:[#allocation2 + $0x30] sm:$0xff] 0.0
          %256 = vst [vmem:[#allocation2 + $0x38] sm:$0xff] 0.0
          %257 = vst [vmem:[#allocation2 + $0x40] sm:$0xff] 0.0
          %258 = vst [vmem:[#allocation2 + $0x48] sm:$0xff] 0.0
          %259 = vst [vmem:[#allocation2 + $0x50] sm:$0xff] 0.0
          %260 = vst [vmem:[#allocation2 + $0x58] sm:$0xff] 0.0
          %261 = vst [vmem:[#allocation2 + $0x60] sm:$0xff] 0.0
          %262 = vst [vmem:[#allocation2 + $0x68] sm:$0xff] 0.0
          %263 = vst [vmem:[#allocation2 + $0x70] sm:$0xff] 0.0
          %264 = vst [vmem:[#allocation2 + $0x78] sm:$0xff] 0.0
          %265 = vst [vmem:[#allocation2 + $0x80] sm:$0xff] 0.0
          %266 = vst [vmem:[#allocation2 + $0x88] sm:$0xff] 0.0
          %267 = vst [vmem:[#allocation2 + $0x90] sm:$0xff] 0.0
          %268 = vst [vmem:[#allocation2 + $0x98] sm:$0xff] 0.0
          %269 = vst [vmem:[#allocation2 + $0xa0] sm:$0xff] 0.0
          %270 = vst [vmem:[#allocation2 + $0xa8] sm:$0xff] 0.0
          %271 = vst [vmem:[#allocation2 + $0xb0] sm:$0xff] 0.0
          %272 = vst [vmem:[#allocation2 + $0xb8] sm:$0xff] 0.0
          %273 = vst [vmem:[#allocation2 + $0xc0] sm:$0xff] 0.0
          %274 = vst [vmem:[#allocation2 + $0xc8] sm:$0xff] 0.0
        $region40: #{tpu_custom_call.1} parent=27 // pred_fallthru
          _
        %s275 = sld [smem:[#allocation5 + %s28]]
        %p276 = scmp.lt.s32.totalorder %s29, %s275
        // Predicated region
        $region41: #{tpu_custom_call.1} parent=27 // pred_check
          %p277 = pneg %p276
        $region42: #{tpu_custom_call.1} parent=27 // pred_check_branch
          %279 = sbr.rel (%p277) target = $region44
        $region43: #{tpu_custom_call.1} parent=27 // pred_region
          %v280 = vlaneseq
          %v281 = vshrl.u32 %v280, 7
          %v282 = vadd.s32 %v281, 8
          %v283 = vadd.s32 %v281, 16
          %v284 = vadd.s32 %v281, 24
          %v285 = vadd.s32 %v281, 32
          %v286 = vadd.s32 %v281, 40
          %v287 = vadd.s32 %v281, 48
          %v288 = vadd.s32 %v281, 56
          %v289 = vadd.s32 %v281, 64
          %v290 = vadd.s32 %v281, 72
          %v291 = vadd.s32 %v281, 80
          %v292 = vadd.s32 %v281, 88
          %v293 = vadd.s32 %v281, 96
          %v294 = vadd.s32 %v281, 104
          %v295 = vadd.s32 %v281, 112
          %v296 = vadd.s32 %v281, 120
          %v297 = vadd.s32 %v281, 128
          %v298 = vadd.s32 %v281, 136
          %v299 = vadd.s32 %v281, 144
          %v300 = vadd.s32 %v281, 152
          %v301 = vadd.s32 %v281, 160
          %v302 = vadd.s32 %v281, 168
          %v303 = vadd.s32 %v281, 176
          %v304 = vadd.s32 %v281, 184
          %v305 = vadd.s32 %v281, 192
          %v306 = vadd.s32 %v281, 200
          %s307 = smul.u32 %s28, 208
          %v308 = vstv %s307
          %v309 = vadd.s32 %v281, %v308
          %v310 = vadd.s32 %v282, %v308
          %v311 = vadd.s32 %v283, %v308
          %v312 = vadd.s32 %v284, %v308
          %v313 = vadd.s32 %v285, %v308
          %v314 = vadd.s32 %v286, %v308
          %v315 = vadd.s32 %v287, %v308
          %v316 = vadd.s32 %v288, %v308
          %v317 = vadd.s32 %v289, %v308
          %v318 = vadd.s32 %v290, %v308
          %v319 = vadd.s32 %v291, %v308
          %v320 = vadd.s32 %v292, %v308
          %v321 = vadd.s32 %v293, %v308
          %v322 = vadd.s32 %v294, %v308
          %v323 = vadd.s32 %v295, %v308
          %v324 = vadd.s32 %v296, %v308
          %v325 = vadd.s32 %v297, %v308
          %v326 = vadd.s32 %v298, %v308
          %v327 = vadd.s32 %v299, %v308
          %v328 = vadd.s32 %v300, %v308
          %v329 = vadd.s32 %v301, %v308
          %v330 = vadd.s32 %v302, %v308
          %v331 = vadd.s32 %v303, %v308
          %v332 = vadd.s32 %v304, %v308
          %v333 = vadd.s32 %v305, %v308
          %v334 = vadd.s32 %v306, %v308
          %v335 = vld [vmem:[%s203] sm:$0xf]
          %v336 = vlaneseq
          %v337 = vshrl.u32 %v336, 7
          %v338 = vsub.s32 0, %v337
          %v339 = vrot.slane %v335, %v338
          %v340 = vlaneseq
          %v341 = vshrl.u32 %v340, 7
          %v342 = vsub.s32 1, %v341
          %v343 = vrot.slane %v335, %v342
          %v344 = vlaneseq
          %v345 = vshrl.u32 %v344, 7
          %v346 = vsub.s32 2, %v345
          %v347 = vrot.slane %v335, %v346
          %v348 = vlaneseq
          %v349 = vshrl.u32 %v348, 7
          %v350 = vsub.s32 3, %v349
          %v351 = vrot.slane %v335, %v350
          %vm352 = vcmp.eq.s32.totalorder %v309, %v339
          %vm353 = vcmp.eq.s32.totalorder %v309, %v343
          %vm354 = vcmp.eq.s32.totalorder %v309, %v347
          %vm355 = vcmp.eq.s32.totalorder %v309, %v351
          %vm356 = vcmp.eq.s32.totalorder %v310, %v339
          %vm357 = vcmp.eq.s32.totalorder %v310, %v343
          %vm358 = vcmp.eq.s32.totalorder %v310, %v347
          %vm359 = vcmp.eq.s32.totalorder %v310, %v351
          %vm360 = vcmp.eq.s32.totalorder %v311, %v339
          %vm361 = vcmp.eq.s32.totalorder %v311, %v343
          %vm362 = vcmp.eq.s32.totalorder %v311, %v347
          %vm363 = vcmp.eq.s32.totalorder %v311, %v351
          %vm364 = vcmp.eq.s32.totalorder %v312, %v339
          %vm365 = vcmp.eq.s32.totalorder %v312, %v343
          %vm366 = vcmp.eq.s32.totalorder %v312, %v347
          %vm367 = vcmp.eq.s32.totalorder %v312, %v351
          %vm368 = vcmp.eq.s32.totalorder %v313, %v339
          %vm369 = vcmp.eq.s32.totalorder %v313, %v343
          %vm370 = vcmp.eq.s32.totalorder %v313, %v347
          %vm371 = vcmp.eq.s32.totalorder %v313, %v351
          %vm372 = vcmp.eq.s32.totalorder %v314, %v339
          %vm373 = vcmp.eq.s32.totalorder %v314, %v343
          %vm374 = vcmp.eq.s32.totalorder %v314, %v347
          %vm375 = vcmp.eq.s32.totalorder %v314, %v351
          %vm376 = vcmp.eq.s32.totalorder %v315, %v339
          %vm377 = vcmp.eq.s32.totalorder %v315, %v343
          %vm378 = vcmp.eq.s32.totalorder %v315, %v347
          %vm379 = vcmp.eq.s32.totalorder %v315, %v351
          %vm380 = vcmp.eq.s32.totalorder %v316, %v339
          %vm381 = vcmp.eq.s32.totalorder %v316, %v343
          %vm382 = vcmp.eq.s32.totalorder %v316, %v347
          %vm383 = vcmp.eq.s32.totalorder %v316, %v351
          %vm384 = vcmp.eq.s32.totalorder %v317, %v339
          %vm385 = vcmp.eq.s32.totalorder %v317, %v343
          %vm386 = vcmp.eq.s32.totalorder %v317, %v347
          %vm387 = vcmp.eq.s32.totalorder %v317, %v351
          %vm388 = vcmp.eq.s32.totalorder %v318, %v339
          %vm389 = vcmp.eq.s32.totalorder %v318, %v343
          %vm390 = vcmp.eq.s32.totalorder %v318, %v347
          %vm391 = vcmp.eq.s32.totalorder %v318, %v351
          %vm392 = vcmp.eq.s32.totalorder %v319, %v339
          %vm393 = vcmp.eq.s32.totalorder %v319, %v343
          %vm394 = vcmp.eq.s32.totalorder %v319, %v347
          %vm395 = vcmp.eq.s32.totalorder %v319, %v351
          %vm396 = vcmp.eq.s32.totalorder %v320, %v339
          %vm397 = vcmp.eq.s32.totalorder %v320, %v343
          %vm398 = vcmp.eq.s32.totalorder %v320, %v347
          %vm399 = vcmp.eq.s32.totalorder %v320, %v351
          %vm400 = vcmp.eq.s32.totalorder %v321, %v339
          %vm401 = vcmp.eq.s32.totalorder %v321, %v343
          %vm402 = vcmp.eq.s32.totalorder %v321, %v347
          %vm403 = vcmp.eq.s32.totalorder %v321, %v351
          %vm404 = vcmp.eq.s32.totalorder %v322, %v339
          %vm405 = vcmp.eq.s32.totalorder %v322, %v343
          %vm406 = vcmp.eq.s32.totalorder %v322, %v347
          %vm407 = vcmp.eq.s32.totalorder %v322, %v351
          %vm408 = vcmp.eq.s32.totalorder %v323, %v339
          %vm409 = vcmp.eq.s32.totalorder %v323, %v343
          %vm410 = vcmp.eq.s32.totalorder %v323, %v347
          %vm411 = vcmp.eq.s32.totalorder %v323, %v351
          %vm412 = vcmp.eq.s32.totalorder %v324, %v339
          %vm413 = vcmp.eq.s32.totalorder %v324, %v343
          %vm414 = vcmp.eq.s32.totalorder %v324, %v347
          %vm415 = vcmp.eq.s32.totalorder %v324, %v351
          %vm416 = vcmp.eq.s32.totalorder %v325, %v339
          %vm417 = vcmp.eq.s32.totalorder %v325, %v343
          %vm418 = vcmp.eq.s32.totalorder %v325, %v347
          %vm419 = vcmp.eq.s32.totalorder %v325, %v351
          %vm420 = vcmp.eq.s32.totalorder %v326, %v339
          %vm421 = vcmp.eq.s32.totalorder %v326, %v343
          %vm422 = vcmp.eq.s32.totalorder %v326, %v347
          %vm423 = vcmp.eq.s32.totalorder %v326, %v351
          %vm424 = vcmp.eq.s32.totalorder %v327, %v339
          %vm425 = vcmp.eq.s32.totalorder %v327, %v343
          %vm426 = vcmp.eq.s32.totalorder %v327, %v347
          %vm427 = vcmp.eq.s32.totalorder %v327, %v351
          %vm428 = vcmp.eq.s32.totalorder %v328, %v339
          %vm429 = vcmp.eq.s32.totalorder %v328, %v343
          %vm430 = vcmp.eq.s32.totalorder %v328, %v347
          %vm431 = vcmp.eq.s32.totalorder %v328, %v351
          %vm432 = vcmp.eq.s32.totalorder %v329, %v339
          %vm433 = vcmp.eq.s32.totalorder %v329, %v343
          %vm434 = vcmp.eq.s32.totalorder %v329, %v347
          %vm435 = vcmp.eq.s32.totalorder %v329, %v351
          %vm436 = vcmp.eq.s32.totalorder %v330, %v339
          %vm437 = vcmp.eq.s32.totalorder %v330, %v343
          %vm438 = vcmp.eq.s32.totalorder %v330, %v347
          %vm439 = vcmp.eq.s32.totalorder %v330, %v351
          %vm440 = vcmp.eq.s32.totalorder %v331, %v339
          %vm441 = vcmp.eq.s32.totalorder %v331, %v343
          %vm442 = vcmp.eq.s32.totalorder %v331, %v347
          %vm443 = vcmp.eq.s32.totalorder %v331, %v351
          %vm444 = vcmp.eq.s32.totalorder %v332, %v339
          %vm445 = vcmp.eq.s32.totalorder %v332, %v343
          %vm446 = vcmp.eq.s32.totalorder %v332, %v347
          %vm447 = vcmp.eq.s32.totalorder %v332, %v351
          %vm448 = vcmp.eq.s32.totalorder %v333, %v339
          %vm449 = vcmp.eq.s32.totalorder %v333, %v343
          %vm450 = vcmp.eq.s32.totalorder %v333, %v347
          %vm451 = vcmp.eq.s32.totalorder %v333, %v351
          %vm452 = vcmp.eq.s32.totalorder %v334, %v339
          %vm453 = vcmp.eq.s32.totalorder %v334, %v343
          %vm454 = vcmp.eq.s32.totalorder %v334, %v347
          %vm455 = vcmp.eq.s32.totalorder %v334, %v351
          %v456 = vsel %vm352, 1, 0
          %v457 = vsel %vm353, 1, 0
          %v458 = vsel %vm354, 1, 0
          %v459 = vsel %vm355, 1, 0
          %v460 = vsel %vm356, 1, 0
          %v461 = vsel %vm357, 1, 0
          %v462 = vsel %vm358, 1, 0
          %v463 = vsel %vm359, 1, 0
          %v464 = vsel %vm360, 1, 0
          %v465 = vsel %vm361, 1, 0
          %v466 = vsel %vm362, 1, 0
          %v467 = vsel %vm363, 1, 0
          %v468 = vsel %vm364, 1, 0
          %v469 = vsel %vm365, 1, 0
          %v470 = vsel %vm366, 1, 0
          %v471 = vsel %vm367, 1, 0
          %v472 = vsel %vm368, 1, 0
          %v473 = vsel %vm369, 1, 0
          %v474 = vsel %vm370, 1, 0
          %v475 = vsel %vm371, 1, 0
          %v476 = vsel %vm372, 1, 0
          %v477 = vsel %vm373, 1, 0
          %v478 = vsel %vm374, 1, 0
          %v479 = vsel %vm375, 1, 0
          %v480 = vsel %vm376, 1, 0
          %v481 = vsel %vm377, 1, 0
          %v482 = vsel %vm378, 1, 0
          %v483 = vsel %vm379, 1, 0
          %v484 = vsel %vm380, 1, 0
          %v485 = vsel %vm381, 1, 0
          %v486 = vsel %vm382, 1, 0
          %v487 = vsel %vm383, 1, 0
          %v488 = vsel %vm384, 1, 0
          %v489 = vsel %vm385, 1, 0
          %v490 = vsel %vm386, 1, 0
          %v491 = vsel %vm387, 1, 0
          %v492 = vsel %vm388, 1, 0
          %v493 = vsel %vm389, 1, 0
          %v494 = vsel %vm390, 1, 0
          %v495 = vsel %vm391, 1, 0
          %v496 = vsel %vm392, 1, 0
          %v497 = vsel %vm393, 1, 0
          %v498 = vsel %vm394, 1, 0
          %v499 = vsel %vm395, 1, 0
          %v500 = vsel %vm396, 1, 0
          %v501 = vsel %vm397, 1, 0
          %v502 = vsel %vm398, 1, 0
          %v503 = vsel %vm399, 1, 0
          %v504 = vsel %vm400, 1, 0
          %v505 = vsel %vm401, 1, 0
          %v506 = vsel %vm402, 1, 0
          %v507 = vsel %vm403, 1, 0
          %v508 = vsel %vm404, 1, 0
          %v509 = vsel %vm405, 1, 0
          %v510 = vsel %vm406, 1, 0
          %v511 = vsel %vm407, 1, 0
          %v512 = vsel %vm408, 1, 0
          %v513 = vsel %vm409, 1, 0
          %v514 = vsel %vm410, 1, 0
          %v515 = vsel %vm411, 1, 0
          %v516 = vsel %vm412, 1, 0
          %v517 = vsel %vm413, 1, 0
          %v518 = vsel %vm414, 1, 0
          %v519 = vsel %vm415, 1, 0
          %v520 = vsel %vm416, 1, 0
          %v521 = vsel %vm417, 1, 0
          %v522 = vsel %vm418, 1, 0
          %v523 = vsel %vm419, 1, 0
          %v524 = vsel %vm420, 1, 0
          %v525 = vsel %vm421, 1, 0
          %v526 = vsel %vm422, 1, 0
          %v527 = vsel %vm423, 1, 0
          %v528 = vsel %vm424, 1, 0
          %v529 = vsel %vm425, 1, 0
          %v530 = vsel %vm426, 1, 0
          %v531 = vsel %vm427, 1, 0
          %v532 = vsel %vm428, 1, 0
          %v533 = vsel %vm429, 1, 0
          %v534 = vsel %vm430, 1, 0
          %v535 = vsel %vm431, 1, 0
          %v536 = vsel %vm432, 1, 0
          %v537 = vsel %vm433, 1, 0
          %v538 = vsel %vm434, 1, 0
          %v539 = vsel %vm435, 1, 0
          %v540 = vsel %vm436, 1, 0
          %v541 = vsel %vm437, 1, 0
          %v542 = vsel %vm438, 1, 0
          %v543 = vsel %vm439, 1, 0
          %v544 = vsel %vm440, 1, 0
          %v545 = vsel %vm441, 1, 0
          %v546 = vsel %vm442, 1, 0
          %v547 = vsel %vm443, 1, 0
          %v548 = vsel %vm444, 1, 0
          %v549 = vsel %vm445, 1, 0
          %v550 = vsel %vm446, 1, 0
          %v551 = vsel %vm447, 1, 0
          %v552 = vsel %vm448, 1, 0
          %v553 = vsel %vm449, 1, 0
          %v554 = vsel %vm450, 1, 0
          %v555 = vsel %vm451, 1, 0
          %v556 = vsel %vm452, 1, 0
          %v557 = vsel %vm453, 1, 0
          %v558 = vsel %vm454, 1, 0
          %v559 = vsel %vm455, 1, 0
          %v560 = vcvt.s32.f32 %v456
          %v561 = vcvt.s32.f32 %v457
          %v562 = vcvt.s32.f32 %v458
          %v563 = vcvt.s32.f32 %v459
          %v564 = vcvt.s32.f32 %v460
          %v565 = vcvt.s32.f32 %v461
          %v566 = vcvt.s32.f32 %v462
          %v567 = vcvt.s32.f32 %v463
          %v568 = vcvt.s32.f32 %v464
          %v569 = vcvt.s32.f32 %v465
          %v570 = vcvt.s32.f32 %v466
          %v571 = vcvt.s32.f32 %v467
          %v572 = vcvt.s32.f32 %v468
          %v573 = vcvt.s32.f32 %v469
          %v574 = vcvt.s32.f32 %v470
          %v575 = vcvt.s32.f32 %v471
          %v576 = vcvt.s32.f32 %v472
          %v577 = vcvt.s32.f32 %v473
          %v578 = vcvt.s32.f32 %v474
          %v579 = vcvt.s32.f32 %v475
          %v580 = vcvt.s32.f32 %v476
          %v581 = vcvt.s32.f32 %v477
          %v582 = vcvt.s32.f32 %v478
          %v583 = vcvt.s32.f32 %v479
          %v584 = vcvt.s32.f32 %v480
          %v585 = vcvt.s32.f32 %v481
          %v586 = vcvt.s32.f32 %v482
          %v587 = vcvt.s32.f32 %v483
          %v588 = vcvt.s32.f32 %v484
          %v589 = vcvt.s32.f32 %v485
          %v590 = vcvt.s32.f32 %v486
          %v591 = vcvt.s32.f32 %v487
          %v592 = vcvt.s32.f32 %v488
          %v593 = vcvt.s32.f32 %v489
          %v594 = vcvt.s32.f32 %v490
          %v595 = vcvt.s32.f32 %v491
          %v596 = vcvt.s32.f32 %v492
          %v597 = vcvt.s32.f32 %v493
          %v598 = vcvt.s32.f32 %v494
          %v599 = vcvt.s32.f32 %v495
          %v600 = vcvt.s32.f32 %v496
          %v601 = vcvt.s32.f32 %v497
          %v602 = vcvt.s32.f32 %v498
          %v603 = vcvt.s32.f32 %v499
          %v604 = vcvt.s32.f32 %v500
          %v605 = vcvt.s32.f32 %v501
          %v606 = vcvt.s32.f32 %v502
          %v607 = vcvt.s32.f32 %v503
          %v608 = vcvt.s32.f32 %v504
          %v609 = vcvt.s32.f32 %v505
          %v610 = vcvt.s32.f32 %v506
          %v611 = vcvt.s32.f32 %v507
          %v612 = vcvt.s32.f32 %v508
          %v613 = vcvt.s32.f32 %v509
          %v614 = vcvt.s32.f32 %v510
          %v615 = vcvt.s32.f32 %v511
          %v616 = vcvt.s32.f32 %v512
          %v617 = vcvt.s32.f32 %v513
          %v618 = vcvt.s32.f32 %v514
          %v619 = vcvt.s32.f32 %v515
          %v620 = vcvt.s32.f32 %v516
          %v621 = vcvt.s32.f32 %v517
          %v622 = vcvt.s32.f32 %v518
          %v623 = vcvt.s32.f32 %v519
          %v624 = vcvt.s32.f32 %v520
          %v625 = vcvt.s32.f32 %v521
          %v626 = vcvt.s32.f32 %v522
          %v627 = vcvt.s32.f32 %v523
          %v628 = vcvt.s32.f32 %v524
          %v629 = vcvt.s32.f32 %v525
          %v630 = vcvt.s32.f32 %v526
          %v631 = vcvt.s32.f32 %v527
          %v632 = vcvt.s32.f32 %v528
          %v633 = vcvt.s32.f32 %v529
          %v634 = vcvt.s32.f32 %v530
          %v635 = vcvt.s32.f32 %v531
          %v636 = vcvt.s32.f32 %v532
          %v637 = vcvt.s32.f32 %v533
          %v638 = vcvt.s32.f32 %v534
          %v639 = vcvt.s32.f32 %v535
          %v640 = vcvt.s32.f32 %v536
          %v641 = vcvt.s32.f32 %v537
          %v642 = vcvt.s32.f32 %v538
          %v643 = vcvt.s32.f32 %v539
          %v644 = vcvt.s32.f32 %v540
          %v645 = vcvt.s32.f32 %v541
          %v646 = vcvt.s32.f32 %v542
          %v647 = vcvt.s32.f32 %v543
          %v648 = vcvt.s32.f32 %v544
          %v649 = vcvt.s32.f32 %v545
          %v650 = vcvt.s32.f32 %v546
          %v651 = vcvt.s32.f32 %v547
          %v652 = vcvt.s32.f32 %v548
          %v653 = vcvt.s32.f32 %v549
          %v654 = vcvt.s32.f32 %v550
          %v655 = vcvt.s32.f32 %v551
          %v656 = vcvt.s32.f32 %v552
          %v657 = vcvt.s32.f32 %v553
          %v658 = vcvt.s32.f32 %v554
          %v659 = vcvt.s32.f32 %v555
          %v660 = vcvt.s32.f32 %v556
          %v661 = vcvt.s32.f32 %v557
          %v662 = vcvt.s32.f32 %v558
          %v663 = vcvt.s32.f32 %v559
          %v664 = vpack.c.bf16 %v564, %v560
          %v665 = vpack.c.bf16 %v565, %v561
          %v666 = vpack.c.bf16 %v566, %v562
          %v667 = vpack.c.bf16 %v567, %v563
          %v668 = vpack.c.bf16 %v572, %v568
          %v669 = vpack.c.bf16 %v573, %v569
          %v670 = vpack.c.bf16 %v574, %v570
          %v671 = vpack.c.bf16 %v575, %v571
          %v672 = vpack.c.bf16 %v580, %v576
          %v673 = vpack.c.bf16 %v581, %v577
          %v674 = vpack.c.bf16 %v582, %v578
          %v675 = vpack.c.bf16 %v583, %v579
          %v676 = vpack.c.bf16 %v588, %v584
          %v677 = vpack.c.bf16 %v589, %v585
          %v678 = vpack.c.bf16 %v590, %v586
          %v679 = vpack.c.bf16 %v591, %v587
          %v680 = vpack.c.bf16 %v596, %v592
          %v681 = vpack.c.bf16 %v597, %v593
          %v682 = vpack.c.bf16 %v598, %v594
          %v683 = vpack.c.bf16 %v599, %v595
          %v684 = vpack.c.bf16 %v604, %v600
          %v685 = vpack.c.bf16 %v605, %v601
          %v686 = vpack.c.bf16 %v606, %v602
          %v687 = vpack.c.bf16 %v607, %v603
          %v688 = vpack.c.bf16 %v612, %v608
          %v689 = vpack.c.bf16 %v613, %v609
          %v690 = vpack.c.bf16 %v614, %v610
          %v691 = vpack.c.bf16 %v615, %v611
          %v692 = vpack.c.bf16 %v620, %v616
          %v693 = vpack.c.bf16 %v621, %v617
          %v694 = vpack.c.bf16 %v622, %v618
          %v695 = vpack.c.bf16 %v623, %v619
          %v696 = vpack.c.bf16 %v628, %v624
          %v697 = vpack.c.bf16 %v629, %v625
          %v698 = vpack.c.bf16 %v630, %v626
          %v699 = vpack.c.bf16 %v631, %v627
          %v700 = vpack.c.bf16 %v636, %v632
          %v701 = vpack.c.bf16 %v637, %v633
          %v702 = vpack.c.bf16 %v638, %v634
          %v703 = vpack.c.bf16 %v639, %v635
          %v704 = vpack.c.bf16 %v644, %v640
          %v705 = vpack.c.bf16 %v645, %v641
          %v706 = vpack.c.bf16 %v646, %v642
          %v707 = vpack.c.bf16 %v647, %v643
          %v708 = vpack.c.bf16 %v652, %v648
          %v709 = vpack.c.bf16 %v653, %v649
          %v710 = vpack.c.bf16 %v654, %v650
          %v711 = vpack.c.bf16 %v655, %v651
          %v712 = vpack.c.bf16 %v660, %v656
          %v713 = vpack.c.bf16 %v661, %v657
          %v714 = vpack.c.bf16 %v662, %v658
          %v715 = vpack.c.bf16 %v663, %v659
          %v716 = vld [vmem:[#allocation2] sm:$0xff]
          %v717 = vld [vmem:[#allocation2 + $0x8] sm:$0xff]
          %v718 = vld [vmem:[#allocation2 + $0x10] sm:$0xff]
          %v719 = vld [vmem:[#allocation2 + $0x18] sm:$0xff]
          %v720 = vld [vmem:[#allocation2 + $0x20] sm:$0xff]
          %v721 = vld [vmem:[#allocation2 + $0x28] sm:$0xff]
          %v722 = vld [vmem:[#allocation2 + $0x30] sm:$0xff]
          %v723 = vld [vmem:[#allocation2 + $0x38] sm:$0xff]
          %v724 = vld [vmem:[#allocation2 + $0x40] sm:$0xff]
          %v725 = vld [vmem:[#allocation2 + $0x48] sm:$0xff]
          %v726 = vld [vmem:[#allocation2 + $0x50] sm:$0xff]
          %v727 = vld [vmem:[#allocation2 + $0x58] sm:$0xff]
          %v728 = vld [vmem:[#allocation2 + $0x60] sm:$0xff]
          %v729 = vld [vmem:[#allocation2 + $0x68] sm:$0xff]
          %v730 = vld [vmem:[#allocation2 + $0x70] sm:$0xff]
          %v731 = vld [vmem:[#allocation2 + $0x78] sm:$0xff]
          %v732 = vld [vmem:[#allocation2 + $0x80] sm:$0xff]
          %v733 = vld [vmem:[#allocation2 + $0x88] sm:$0xff]
          %v734 = vld [vmem:[#allocation2 + $0x90] sm:$0xff]
          %v735 = vld [vmem:[#allocation2 + $0x98] sm:$0xff]
          %v736 = vld [vmem:[#allocation2 + $0xa0] sm:$0xff]
          %v737 = vld [vmem:[#allocation2 + $0xa8] sm:$0xff]
          %v738 = vld [vmem:[#allocation2 + $0xb0] sm:$0xff]
          %v739 = vld [vmem:[#allocation2 + $0xb8] sm:$0xff]
          %v740 = vld [vmem:[#allocation2 + $0xc0] sm:$0xff]
          %v741 = vld [vmem:[#allocation2 + $0xc8] sm:$0xff]
          %v742 = vld [vmem:[%s212] sm:$0xf]
          %v743 = vld [vmem:[%s212 + $0x4] sm:$0xf]
          %v744 = vld [vmem:[%s212 + $0x8] sm:$0xf]
          %v745 = vld [vmem:[%s212 + $0xc] sm:$0xf]
          %v746 = vld [vmem:[%s212 + $0x10] sm:$0xf]
          %v747 = vld [vmem:[%s212 + $0x14] sm:$0xf]
          %v748 = vld [vmem:[%s212 + $0x18] sm:$0xf]
          %v749 = vld [vmem:[%s212 + $0x1c] sm:$0xf]
          %v750 = vld [vmem:[%s212 + $0x20] sm:$0xf]
          %v751 = vld [vmem:[%s212 + $0x24] sm:$0xf]
          %v752 = vld [vmem:[%s212 + $0x28] sm:$0xf]
          %v753 = vld [vmem:[%s212 + $0x2c] sm:$0xf]
          %v754 = vld [vmem:[%s212 + $0x30] sm:$0xf]
          %v755 = vld [vmem:[%s212 + $0x34] sm:$0xf]
          %v756 = vld [vmem:[%s212 + $0x38] sm:$0xf]
          %v757 = vld [vmem:[%s212 + $0x3c] sm:$0xf]
          %v758 = vld [vmem:[%s212 + $0x40] sm:$0xf]
          %v759 = vld [vmem:[%s212 + $0x44] sm:$0xf]
          %v760 = vld [vmem:[%s212 + $0x48] sm:$0xf]
          %v761 = vld [vmem:[%s212 + $0x4c] sm:$0xf]
          %v762 = vld [vmem:[%s212 + $0x50] sm:$0xf]
          %v763 = vld [vmem:[%s212 + $0x54] sm:$0xf]
          %v764 = vld [vmem:[%s212 + $0x58] sm:$0xf]
          %v765 = vld [vmem:[%s212 + $0x5c] sm:$0xf]
          %v766 = vld [vmem:[%s212 + $0x60] sm:$0xf]
          %v767 = vld [vmem:[%s212 + $0x64] sm:$0xf]
          %v768 = vld [vmem:[%s212 + $0x68] sm:$0xf]
          %v769 = vld [vmem:[%s212 + $0x6c] sm:$0xf]
          %v770 = vld [vmem:[%s212 + $0x70] sm:$0xf]
          %v771 = vld [vmem:[%s212 + $0x74] sm:$0xf]
          %v772 = vld [vmem:[%s212 + $0x78] sm:$0xf]
          %v773 = vld [vmem:[%s212 + $0x7c] sm:$0xf]
          %v774 = vld [vmem:[%s212 + $0x80] sm:$0xf]
          %v775 = vld [vmem:[%s212 + $0x84] sm:$0xf]
          %v776 = vld [vmem:[%s212 + $0x88] sm:$0xf]
          %v777 = vld [vmem:[%s212 + $0x8c] sm:$0xf]
          %v778 = vld [vmem:[%s212 + $0x90] sm:$0xf]
          %v779 = vld [vmem:[%s212 + $0x94] sm:$0xf]
          %v780 = vld [vmem:[%s212 + $0x98] sm:$0xf]
          %v781 = vld [vmem:[%s212 + $0x9c] sm:$0xf]
          %v782 = vld [vmem:[%s212 + $0xa0] sm:$0xf]
          %v783 = vld [vmem:[%s212 + $0xa4] sm:$0xf]
          %v784 = vld [vmem:[%s212 + $0xa8] sm:$0xf]
          %v785 = vld [vmem:[%s212 + $0xac] sm:$0xf]
          %v786 = vld [vmem:[%s212 + $0xb0] sm:$0xf]
          %v787 = vld [vmem:[%s212 + $0xb4] sm:$0xf]
          %v788 = vld [vmem:[%s212 + $0xb8] sm:$0xf]
          %v789 = vld [vmem:[%s212 + $0xbc] sm:$0xf]
          %v790 = vld [vmem:[%s212 + $0xc0] sm:$0xf]
          %v791 = vld [vmem:[%s212 + $0xc4] sm:$0xf]
          %v792 = vld [vmem:[%s212 + $0xc8] sm:$0xf]
          %v793 = vld [vmem:[%s212 + $0xcc] sm:$0xf]
          %v794 = vld [vmem:[%s212 + $0xd0] sm:$0xf]
          %v795 = vld [vmem:[%s212 + $0xd4] sm:$0xf]
          %v796 = vld [vmem:[%s212 + $0xd8] sm:$0xf]
          %v797 = vld [vmem:[%s212 + $0xdc] sm:$0xf]
          %v798 = vld [vmem:[%s212 + $0xe0] sm:$0xf]
          %v799 = vld [vmem:[%s212 + $0xe4] sm:$0xf]
          %v800 = vld [vmem:[%s212 + $0xe8] sm:$0xf]
          %v801 = vld [vmem:[%s212 + $0xec] sm:$0xf]
          %v802 = vld [vmem:[%s212 + $0xf0] sm:$0xf]
          %v803 = vld [vmem:[%s212 + $0xf4] sm:$0xf]
          %v804 = vld [vmem:[%s212 + $0xf8] sm:$0xf]
          %v805 = vld [vmem:[%s212 + $0xfc] sm:$0xf]
          %v870 = vunpack.c.l.b16 %v742
          %v871 = vunpack.c.l.b16 %v743
          %v872 = vunpack.c.l.b16 %v744
          %v873 = vunpack.c.l.b16 %v745
          %v874 = vunpack.c.l.b16 %v746
          %v875 = vunpack.c.l.b16 %v747
          %v876 = vunpack.c.l.b16 %v748
          %v877 = vunpack.c.l.b16 %v749
          %v878 = vunpack.c.l.b16 %v750
          %v879 = vunpack.c.l.b16 %v751
          %v880 = vunpack.c.l.b16 %v752
          %v881 = vunpack.c.l.b16 %v753
          %v882 = vunpack.c.l.b16 %v754
          %v883 = vunpack.c.l.b16 %v755
          %v884 = vunpack.c.l.b16 %v756
          %v885 = vunpack.c.l.b16 %v757
          %v886 = vunpack.c.l.b16 %v758
          %v887 = vunpack.c.l.b16 %v759
          %v888 = vunpack.c.l.b16 %v760
          %v889 = vunpack.c.l.b16 %v761
          %v890 = vunpack.c.l.b16 %v762
          %v891 = vunpack.c.l.b16 %v763
          %v892 = vunpack.c.l.b16 %v764
          %v893 = vunpack.c.l.b16 %v765
          %v894 = vunpack.c.l.b16 %v766
          %v895 = vunpack.c.l.b16 %v767
          %v896 = vunpack.c.l.b16 %v768
          %v897 = vunpack.c.l.b16 %v769
          %v898 = vunpack.c.l.b16 %v770
          %v899 = vunpack.c.l.b16 %v771
          %v900 = vunpack.c.l.b16 %v772
          %v901 = vunpack.c.l.b16 %v773
          %v902 = vunpack.c.l.b16 %v774
          %v903 = vunpack.c.l.b16 %v775
          %v904 = vunpack.c.l.b16 %v776
          %v905 = vunpack.c.l.b16 %v777
          %v906 = vunpack.c.l.b16 %v778
          %v907 = vunpack.c.l.b16 %v779
          %v908 = vunpack.c.l.b16 %v780
          %v909 = vunpack.c.l.b16 %v781
          %v910 = vunpack.c.l.b16 %v782
          %v911 = vunpack.c.l.b16 %v783
          %v912 = vunpack.c.l.b16 %v784
          %v913 = vunpack.c.l.b16 %v785
          %v914 = vunpack.c.l.b16 %v786
          %v915 = vunpack.c.l.b16 %v787
          %v916 = vunpack.c.l.b16 %v788
          %v917 = vunpack.c.l.b16 %v789
          %v918 = vunpack.c.l.b16 %v790
          %v919 = vunpack.c.l.b16 %v791
          %v920 = vunpack.c.l.b16 %v792
          %v921 = vunpack.c.l.b16 %v793
          %v922 = vunpack.c.l.b16 %v794
          %v923 = vunpack.c.l.b16 %v795
          %v924 = vunpack.c.l.b16 %v796
          %v925 = vunpack.c.l.b16 %v797
          %v926 = vunpack.c.l.b16 %v798
          %v927 = vunpack.c.l.b16 %v799
          %v928 = vunpack.c.l.b16 %v800
          %v929 = vunpack.c.l.b16 %v801
          %v930 = vunpack.c.l.b16 %v802
          %v931 = vunpack.c.l.b16 %v803
          %v932 = vunpack.c.l.b16 %v804
          %v933 = vunpack.c.l.b16 %v805
          %v934 = vpack.c.b16 %v871, %v870
          %v935 = vpack.c.b16 %v873, %v872
          %v936 = vpack.c.b16 %v875, %v874
          %v937 = vpack.c.b16 %v877, %v876
          %v938 = vpack.c.b16 %v879, %v878
          %v939 = vpack.c.b16 %v881, %v880
          %v940 = vpack.c.b16 %v883, %v882
          %v941 = vpack.c.b16 %v885, %v884
          %v942 = vpack.c.b16 %v887, %v886
          %v943 = vpack.c.b16 %v889, %v888
          %v944 = vpack.c.b16 %v891, %v890
          %v945 = vpack.c.b16 %v893, %v892
          %v946 = vpack.c.b16 %v895, %v894
          %v947 = vpack.c.b16 %v897, %v896
          %v948 = vpack.c.b16 %v899, %v898
          %v949 = vpack.c.b16 %v901, %v900
          %v950 = vpack.c.b16 %v903, %v902
          %v951 = vpack.c.b16 %v905, %v904
          %v952 = vpack.c.b16 %v907, %v906
          %v953 = vpack.c.b16 %v909, %v908
          %v954 = vpack.c.b16 %v911, %v910
          %v955 = vpack.c.b16 %v913, %v912
          %v956 = vpack.c.b16 %v915, %v914
          %v957 = vpack.c.b16 %v917, %v916
          %v958 = vpack.c.b16 %v919, %v918
          %v959 = vpack.c.b16 %v921, %v920
          %v960 = vpack.c.b16 %v923, %v922
          %v961 = vpack.c.b16 %v925, %v924
          %v962 = vpack.c.b16 %v927, %v926
          %v963 = vpack.c.b16 %v929, %v928
          %v964 = vpack.c.b16 %v931, %v930
          %v965 = vpack.c.b16 %v933, %v932
          %998 = vmatprep.subr.bf16.mxu0 0
          %999 = vmatpush1.bf16.msra.mxu0 %v934
          %1000 = vmatprep.subr.bf16.mxu0 0
          %1001 = vmatpush1.bf16.msra.mxu0 %v935
          %1002 = vmatprep.subr.bf16.mxu0 0
          %1003 = vmatpush1.bf16.msra.mxu0 %v936
          %1004 = vmatprep.subr.bf16.mxu0 0
          %1005 = vmatpush1.bf16.msra.mxu0 %v937
          %1006 = vmatprep.subr.bf16.mxu0 0
          %1007 = vmatpush1.bf16.msra.mxu0 %v938
          %1008 = vmatprep.subr.bf16.mxu0 0
          %1009 = vmatpush1.bf16.msra.mxu0 %v939
          %1010 = vmatprep.subr.bf16.mxu0 0
          %1011 = vmatpush1.bf16.msra.mxu0 %v940
          %1012 = vmatprep.subr.bf16.mxu0 0
          %1013 = vmatpush1.bf16.msra.mxu0 %v941
          %1014 = vmatprep.subr.bf16.mxu0 0
          %1015 = vmatpush1.bf16.msra.mxu0 %v942
          %1016 = vmatprep.subr.bf16.mxu0 0
          %1017 = vmatpush1.bf16.msra.mxu0 %v943
          %1018 = vmatprep.subr.bf16.mxu0 0
          %1019 = vmatpush1.bf16.msra.mxu0 %v944
          %1020 = vmatprep.subr.bf16.mxu0 0
          %1021 = vmatpush1.bf16.msra.mxu0 %v945
          %1022 = vmatprep.subr.bf16.mxu0 0
          %1023 = vmatpush1.bf16.msra.mxu0 %v946
          %1024 = vmatprep.subr.bf16.mxu0 0
          %1025 = vmatpush1.bf16.msra.mxu0 %v947
          %1026 = vmatprep.subr.bf16.mxu0 0
          %1027 = vmatpush1.bf16.msra.mxu0 %v948
          %1028 = vmatprep.subr.bf16.mxu0 0
          %1029 = vmatpush1.bf16.msra.mxu0 %v949
          %1030 = vmatprep.mubr.bf16.mxu0 %v665
          %1031 = vmatmul.mubr.bf16.gmra.mrb[0].mxu0 %v664
          %v1032 = vpop.f32.mrb[0].mxu0
          %v1033 = vadd.f32 0.0, %v1032
          %v1034 = vpop.f32.mrb[0].mxu0
          %v1035 = vpop.f32.mrb[0].mxu0
          %v1036 = vadd.f32 0.0, %v1035
          %v1037 = vpop.f32.mrb[0].mxu0
          %1038 = vmatprep.mubr.bf16.mxu0 %v669
          %1039 = vmatmul.mubr.bf16.gmra.mrb[0].mxu0 %v668
          %v1040 = vpop.f32.mrb[0].mxu0
          %v1041 = vadd.f32 0.0, %v1040
          %v1042 = vpop.f32.mrb[0].mxu0
          %v1043 = vpop.f32.mrb[0].mxu0
          %v1044 = vadd.f32 0.0, %v1043
          %v1045 = vpop.f32.mrb[0].mxu0
          %1046 = vmatprep.mubr.bf16.mxu0 %v673
          %1047 = vmatmul.mubr.bf16.gmra.mrb[0].mxu0 %v672
          %v1048 = vpop.f32.mrb[0].mxu0
          %v1049 = vadd.f32 0.0, %v1048
          %v1050 = vpop.f32.mrb[0].mxu0
          %v1051 = vpop.f32.mrb[0].mxu0
          %v1052 = vadd.f32 0.0, %v1051
          %v1053 = vpop.f32.mrb[0].mxu0
          %1054 = vmatprep.mubr.bf16.mxu0 %v677
          %1055 = vmatmul.mubr.bf16.gmra.mrb[0].mxu0 %v676
          %v1056 = vpop.f32.mrb[0].mxu0
          %v1057 = vadd.f32 0.0, %v1056
          %v1058 = vpop.f32.mrb[0].mxu0
          %v1059 = vpop.f32.mrb[0].mxu0
          %v1060 = vadd.f32 0.0, %v1059
          %v1061 = vpop.f32.mrb[0].mxu0
          %1062 = vmatprep.mubr.bf16.mxu0 %v681
          %1063 = vmatmul.mubr.bf16.gmra.mrb[0].mxu0 %v680
          %v1064 = vpop.f32.mrb[0].mxu0
          %v1065 = vadd.f32 0.0, %v1064
          %v1066 = vpop.f32.mrb[0].mxu0
          %v1067 = vpop.f32.mrb[0].mxu0
          %v1068 = vadd.f32 0.0, %v1067
          %v1069 = vpop.f32.mrb[0].mxu0
          %1070 = vmatprep.mubr.bf16.mxu0 %v685
          %1071 = vmatmul.mubr.bf16.gmra.mrb[0].mxu0 %v684
          %v1072 = vpop.f32.mrb[0].mxu0
          %v1073 = vadd.f32 0.0, %v1072
          %v1074 = vpop.f32.mrb[0].mxu0
          %v1075 = vpop.f32.mrb[0].mxu0
          %v1076 = vadd.f32 0.0, %v1075
          %v1077 = vpop.f32.mrb[0].mxu0
          %1078 = vmatprep.mubr.bf16.mxu0 %v689
          %1079 = vmatmul.mubr.bf16.gmra.mrb[0].mxu0 %v688
          %v1080 = vpop.f32.mrb[0].mxu0
          %v1081 = vadd.f32 0.0, %v1080
          %v1082 = vpop.f32.mrb[0].mxu0
          %v1083 = vpop.f32.mrb[0].mxu0
          %v1084 = vadd.f32 0.0, %v1083
          %v1085 = vpop.f32.mrb[0].mxu0
          %1086 = vmatprep.mubr.bf16.mxu0 %v693
          %1087 = vmatmul.mubr.bf16.gmra.mrb[0].mxu0 %v692
          %v1088 = vpop.f32.mrb[0].mxu0
          %v1089 = vadd.f32 0.0, %v1088
          %v1090 = vpop.f32.mrb[0].mxu0
          %v1091 = vpop.f32.mrb[0].mxu0
          %v1092 = vadd.f32 0.0, %v1091
          %v1093 = vpop.f32.mrb[0].mxu0
          %1094 = vmatprep.mubr.bf16.mxu0 %v697
          %1095 = vmatmul.mubr.bf16.gmra.mrb[0].mxu0 %v696
          %v1096 = vpop.f32.mrb[0].mxu0
          %v1097 = vadd.f32 0.0, %v1096
          %v1098 = vpop.f32.mrb[0].mxu0
          %v1099 = vpop.f32.mrb[0].mxu0
          %v1100 = vadd.f32 0.0, %v1099
          %v1101 = vpop.f32.mrb[0].mxu0
          %1102 = vmatprep.mubr.bf16.mxu0 %v701
          %1103 = vmatmul.mubr.bf16.gmra.mrb[0].mxu0 %v700
          %v1104 = vpop.f32.mrb[0].mxu0
          %v1105 = vadd.f32 0.0, %v1104
          %v1106 = vpop.f32.mrb[0].mxu0
          %v1107 = vpop.f32.mrb[0].mxu0
          %v1108 = vadd.f32 0.0, %v1107
          %v1109 = vpop.f32.mrb[0].mxu0
          %1110 = vmatprep.mubr.bf16.mxu0 %v705
          %1111 = vmatmul.mubr.bf16.gmra.mrb[0].mxu0 %v704
          %v1112 = vpop.f32.mrb[0].mxu0
          %v1113 = vadd.f32 0.0, %v1112
          %v1114 = vpop.f32.mrb[0].mxu0
          %v1115 = vpop.f32.mrb[0].mxu0
          %v1116 = vadd.f32 0.0, %v1115
          %v1117 = vpop.f32.mrb[0].mxu0
          %1118 = vmatprep.mubr.bf16.mxu0 %v709
          %1119 = vmatmul.mubr.bf16.gmra.mrb[0].mxu0 %v708
          %v1120 = vpop.f32.mrb[0].mxu0
          %v1121 = vadd.f32 0.0, %v1120
          %v1122 = vpop.f32.mrb[0].mxu0
          %v1123 = vpop.f32.mrb[0].mxu0
          %v1124 = vadd.f32 0.0, %v1123
          %v1125 = vpop.f32.mrb[0].mxu0
          %1126 = vmatprep.mubr.bf16.mxu0 %v713
          %1127 = vmatmul.mubr.bf16.gmra.mrb[0].mxu0 %v712
          %v1128 = vpop.f32.mrb[0].mxu0
          %v1129 = vadd.f32 0.0, %v1128
          %v1130 = vpop.f32.mrb[0].mxu0
          %v1131 = vpop.f32.mrb[0].mxu0
          %v1132 = vadd.f32 0.0, %v1131
          %v1133 = vpop.f32.mrb[0].mxu0
          %1134 = vdwg.mxu0
          %1135 = vmatprep.subr.bf16.mxu0 0
          %1136 = vmatpush1.bf16.msra.mxu0 %v950
          %1137 = vmatprep.subr.bf16.mxu0 0
          %1138 = vmatpush1.bf16.msra.mxu0 %v951
          %1139 = vmatprep.subr.bf16.mxu0 0
          %1140 = vmatpush1.bf16.msra.mxu0 %v952
          %1141 = vmatprep.subr.bf16.mxu0 0
          %1142 = vmatpush1.bf16.msra.mxu0 %v953
          %1143 = vmatprep.subr.bf16.mxu0 0
          %1144 = vmatpush1.bf16.msra.mxu0 %v954
          %1145 = vmatprep.subr.bf16.mxu0 0
          %1146 = vmatpush1.bf16.msra.mxu0 %v955
          %1147 = vmatprep.subr.bf16.mxu0 0
          %1148 = vmatpush1.bf16.msra.mxu0 %v956
          %1149 = vmatprep.subr.bf16.mxu0 0
          %1150 = vmatpush1.bf16.msra.mxu0 %v957
          %1151 = vmatprep.subr.bf16.mxu0 0
          %1152 = vmatpush1.bf16.msra.mxu0 %v958
          %1153 = vmatprep.subr.bf16.mxu0 0
          %1154 = vmatpush1.bf16.msra.mxu0 %v959
          %1155 = vmatprep.subr.bf16.mxu0 0
          %1156 = vmatpush1.bf16.msra.mxu0 %v960
          %1157 = vmatprep.subr.bf16.mxu0 0
          %1158 = vmatpush1.bf16.msra.mxu0 %v961
          %1159 = vmatprep.subr.bf16.mxu0 0
          %1160 = vmatpush1.bf16.msra.mxu0 %v962
          %1161 = vmatprep.subr.bf16.mxu0 0
          %1162 = vmatpush1.bf16.msra.mxu0 %v963
          %1163 = vmatprep.subr.bf16.mxu0 0
          %1164 = vmatpush1.bf16.msra.mxu0 %v964
          %1165 = vmatprep.subr.bf16.mxu0 0
          %1166 = vmatpush1.bf16.msra.mxu0 %v965
          %1167 = vmatprep.mubr.bf16.mxu0 %v667
          %1168 = vmatmul.mubr.bf16.gmra.mrb[0].mxu0 %v666
          %v1169 = vpop.f32.mrb[0].mxu0
          %v1170 = vadd.f32 %v1033, %v1169
          %v1171 = vpop.f32.mrb[0].mxu0
          %v1172 = vpop.f32.mrb[0].mxu0
          %v1173 = vadd.f32 %v1036, %v1172
          %v1174 = vpop.f32.mrb[0].mxu0
          %1175 = vmatprep.mubr.bf16.mxu0 %v671
          %1176 = vmatmul.mubr.bf16.gmra.mrb[0].mxu0 %v670
          %v1177 = vpop.f32.mrb[0].mxu0
          %v1178 = vadd.f32 %v1041, %v1177
          %v1179 = vpop.f32.mrb[0].mxu0
          %v1180 = vpop.f32.mrb[0].mxu0
          %v1181 = vadd.f32 %v1044, %v1180
          %v1182 = vpop.f32.mrb[0].mxu0
          %1183 = vmatprep.mubr.bf16.mxu0 %v675
          %1184 = vmatmul.mubr.bf16.gmra.mrb[0].mxu0 %v674
          %v1185 = vpop.f32.mrb[0].mxu0
          %v1186 = vadd.f32 %v1049, %v1185
          %v1187 = vpop.f32.mrb[0].mxu0
          %v1188 = vpop.f32.mrb[0].mxu0
          %v1189 = vadd.f32 %v1052, %v1188
          %v1190 = vpop.f32.mrb[0].mxu0
          %1191 = vmatprep.mubr.bf16.mxu0 %v679
          %1192 = vmatmul.mubr.bf16.gmra.mrb[0].mxu0 %v678
          %v1193 = vpop.f32.mrb[0].mxu0
          %v1194 = vadd.f32 %v1057, %v1193
          %v1195 = vpop.f32.mrb[0].mxu0
          %v1196 = vpop.f32.mrb[0].mxu0
          %v1197 = vadd.f32 %v1060, %v1196
          %v1198 = vpop.f32.mrb[0].mxu0
          %1199 = vmatprep.mubr.bf16.mxu0 %v683
          %1200 = vmatmul.mubr.bf16.gmra.mrb[0].mxu0 %v682
          %v1201 = vpop.f32.mrb[0].mxu0
          %v1202 = vadd.f32 %v1065, %v1201
          %v1203 = vpop.f32.mrb[0].mxu0
          %v1204 = vpop.f32.mrb[0].mxu0
          %v1205 = vadd.f32 %v1068, %v1204
          %v1206 = vpop.f32.mrb[0].mxu0
          %1207 = vmatprep.mubr.bf16.mxu0 %v687
          %1208 = vmatmul.mubr.bf16.gmra.mrb[0].mxu0 %v686
          %v1209 = vpop.f32.mrb[0].mxu0
          %v1210 = vadd.f32 %v1073, %v1209
          %v1211 = vpop.f32.mrb[0].mxu0
          %v1212 = vpop.f32.mrb[0].mxu0
          %v1213 = vadd.f32 %v1076, %v1212
          %v1214 = vpop.f32.mrb[0].mxu0
          %1215 = vmatprep.mubr.bf16.mxu0 %v691
          %1216 = vmatmul.mubr.bf16.gmra.mrb[0].mxu0 %v690
          %v1217 = vpop.f32.mrb[0].mxu0
          %v1218 = vadd.f32 %v1081, %v1217
          %v1219 = vpop.f32.mrb[0].mxu0
          %v1220 = vpop.f32.mrb[0].mxu0
          %v1221 = vadd.f32 %v1084, %v1220
          %v1222 = vpop.f32.mrb[0].mxu0
          %1223 = vmatprep.mubr.bf16.mxu0 %v695
          %1224 = vmatmul.mubr.bf16.gmra.mrb[0].mxu0 %v694
          %v1225 = vpop.f32.mrb[0].mxu0
          %v1226 = vadd.f32 %v1089, %v1225
          %v1227 = vpop.f32.mrb[0].mxu0
          %v1228 = vpop.f32.mrb[0].mxu0
          %v1229 = vadd.f32 %v1092, %v1228
          %v1230 = vpop.f32.mrb[0].mxu0
          %1231 = vmatprep.mubr.bf16.mxu0 %v699
          %1232 = vmatmul.mubr.bf16.gmra.mrb[0].mxu0 %v698
          %v1233 = vpop.f32.mrb[0].mxu0
          %v1234 = vadd.f32 %v1097, %v1233
          %v1235 = vpop.f32.mrb[0].mxu0
          %v1236 = vpop.f32.mrb[0].mxu0
          %v1237 = vadd.f32 %v1100, %v1236
          %v1238 = vpop.f32.mrb[0].mxu0
          %1239 = vmatprep.mubr.bf16.mxu0 %v703
          %1240 = vmatmul.mubr.bf16.gmra.mrb[0].mxu0 %v702
          %v1241 = vpop.f32.mrb[0].mxu0
          %v1242 = vadd.f32 %v1105, %v1241
          %v1243 = vpop.f32.mrb[0].mxu0
          %v1244 = vpop.f32.mrb[0].mxu0
          %v1245 = vadd.f32 %v1108, %v1244
          %v1246 = vpop.f32.mrb[0].mxu0
          %1247 = vmatprep.mubr.bf16.mxu0 %v707
          %1248 = vmatmul.mubr.bf16.gmra.mrb[0].mxu0 %v706
          %v1249 = vpop.f32.mrb[0].mxu0
          %v1250 = vadd.f32 %v1113, %v1249
          %v1251 = vpop.f32.mrb[0].mxu0
          %v1252 = vpop.f32.mrb[0].mxu0
          %v1253 = vadd.f32 %v1116, %v1252
          %v1254 = vpop.f32.mrb[0].mxu0
          %1255 = vmatprep.mubr.bf16.mxu0 %v711
          %1256 = vmatmul.mubr.bf16.gmra.mrb[0].mxu0 %v710
          %v1257 = vpop.f32.mrb[0].mxu0
          %v1258 = vadd.f32 %v1121, %v1257
          %v1259 = vpop.f32.mrb[0].mxu0
          %v1260 = vpop.f32.mrb[0].mxu0
          %v1261 = vadd.f32 %v1124, %v1260
          %v1262 = vpop.f32.mrb[0].mxu0
          %1263 = vmatprep.mubr.bf16.mxu0 %v715
          %1264 = vmatmul.mubr.bf16.gmra.mrb[0].mxu0 %v714
          %v1265 = vpop.f32.mrb[0].mxu0
          %v1266 = vadd.f32 %v1129, %v1265
          %v1267 = vpop.f32.mrb[0].mxu0
          %v1268 = vpop.f32.mrb[0].mxu0
          %v1269 = vadd.f32 %v1132, %v1268
          %v1270 = vpop.f32.mrb[0].mxu0
          %1271 = vdwg.mxu0
          %v1272 = vadd.f32 %v716, %v1170
          %v1273 = vadd.f32 %v717, %v1173
          %v1274 = vadd.f32 %v718, %v1178
          %v1275 = vadd.f32 %v719, %v1181
          %v1276 = vadd.f32 %v720, %v1186
          %v1277 = vadd.f32 %v721, %v1189
          %v1278 = vadd.f32 %v722, %v1194
          %v1279 = vadd.f32 %v723, %v1197
          %v1280 = vadd.f32 %v724, %v1202
          %v1281 = vadd.f32 %v725, %v1205
          %v1282 = vadd.f32 %v726, %v1210
          %v1283 = vadd.f32 %v727, %v1213
          %v1284 = vadd.f32 %v728, %v1218
          %v1285 = vadd.f32 %v729, %v1221
          %v1286 = vadd.f32 %v730, %v1226
          %v1287 = vadd.f32 %v731, %v1229
          %v1288 = vadd.f32 %v732, %v1234
          %v1289 = vadd.f32 %v733, %v1237
          %v1290 = vadd.f32 %v734, %v1242
          %v1291 = vadd.f32 %v735, %v1245
          %v1292 = vadd.f32 %v736, %v1250
          %v1293 = vadd.f32 %v737, %v1253
          %v1294 = vadd.f32 %v738, %v1258
          %v1295 = vadd.f32 %v739, %v1261
          %v1296 = vadd.f32 %v740, %v1266
          %v1297 = vadd.f32 %v741, %v1269
          %1298 = vst [vmem:[#allocation2] sm:$0xff] %v1272
          %1299 = vst [vmem:[#allocation2 + $0x8] sm:$0xff] %v1273
          %1300 = vst [vmem:[#allocation2 + $0x10] sm:$0xff] %v1274
          %1301 = vst [vmem:[#allocation2 + $0x18] sm:$0xff] %v1275
          %1302 = vst [vmem:[#allocation2 + $0x20] sm:$0xff] %v1276
          %1303 = vst [vmem:[#allocation2 + $0x28] sm:$0xff] %v1277
          %1304 = vst [vmem:[#allocation2 + $0x30] sm:$0xff] %v1278
          %1305 = vst [vmem:[#allocation2 + $0x38] sm:$0xff] %v1279
          %1306 = vst [vmem:[#allocation2 + $0x40] sm:$0xff] %v1280
          %1307 = vst [vmem:[#allocation2 + $0x48] sm:$0xff] %v1281
          %1308 = vst [vmem:[#allocation2 + $0x50] sm:$0xff] %v1282
          %1309 = vst [vmem:[#allocation2 + $0x58] sm:$0xff] %v1283
          %1310 = vst [vmem:[#allocation2 + $0x60] sm:$0xff] %v1284
          %1311 = vst [vmem:[#allocation2 + $0x68] sm:$0xff] %v1285
          %1312 = vst [vmem:[#allocation2 + $0x70] sm:$0xff] %v1286
          %1313 = vst [vmem:[#allocation2 + $0x78] sm:$0xff] %v1287
          %1314 = vst [vmem:[#allocation2 + $0x80] sm:$0xff] %v1288
          %1315 = vst [vmem:[#allocation2 + $0x88] sm:$0xff] %v1289
          %1316 = vst [vmem:[#allocation2 + $0x90] sm:$0xff] %v1290
          %1317 = vst [vmem:[#allocation2 + $0x98] sm:$0xff] %v1291
          %1318 = vst [vmem:[#allocation2 + $0xa0] sm:$0xff] %v1292
          %1319 = vst [vmem:[#allocation2 + $0xa8] sm:$0xff] %v1293
          %1320 = vst [vmem:[#allocation2 + $0xb0] sm:$0xff] %v1294
          %1321 = vst [vmem:[#allocation2 + $0xb8] sm:$0xff] %v1295
          %1322 = vst [vmem:[#allocation2 + $0xc0] sm:$0xff] %v1296
          %1323 = vst [vmem:[#allocation2 + $0xc8] sm:$0xff] %v1297
        $region44: #{tpu_custom_call.1} parent=27 // pred_fallthru
          _
        %p1324 = scmp.eq.s32.totalorder %s29, 1
        // Predicated region
        $region45: #{tpu_custom_call.1} parent=27 // pred_check
          %p1325 = pneg %p1324
        $region46: #{tpu_custom_call.1} parent=27 // pred_check_branch
          %1327 = sbr.rel (%p1325) target = $region48
        $region47: #{tpu_custom_call.1} parent=27 // pred_region
          %v1328 = vld [vmem:[#allocation2] sm:$0xff]
          %v1329 = vld [vmem:[#allocation2 + $0x8] sm:$0xff]
          %v1330 = vld [vmem:[#allocation2 + $0x10] sm:$0xff]
          %v1331 = vld [vmem:[#allocation2 + $0x18] sm:$0xff]
          %v1332 = vld [vmem:[#allocation2 + $0x20] sm:$0xff]
          %v1333 = vld [vmem:[#allocation2 + $0x28] sm:$0xff]
          %v1334 = vld [vmem:[#allocation2 + $0x30] sm:$0xff]
          %v1335 = vld [vmem:[#allocation2 + $0x38] sm:$0xff]
          %v1336 = vld [vmem:[#allocation2 + $0x40] sm:$0xff]
          %v1337 = vld [vmem:[#allocation2 + $0x48] sm:$0xff]
          %v1338 = vld [vmem:[#allocation2 + $0x50] sm:$0xff]
          %v1339 = vld [vmem:[#allocation2 + $0x58] sm:$0xff]
          %v1340 = vld [vmem:[#allocation2 + $0x60] sm:$0xff]
          %v1341 = vld [vmem:[#allocation2 + $0x68] sm:$0xff]
          %v1342 = vld [vmem:[#allocation2 + $0x70] sm:$0xff]
          %v1343 = vld [vmem:[#allocation2 + $0x78] sm:$0xff]
          %v1344 = vld [vmem:[#allocation2 + $0x80] sm:$0xff]
          %v1345 = vld [vmem:[#allocation2 + $0x88] sm:$0xff]
          %v1346 = vld [vmem:[#allocation2 + $0x90] sm:$0xff]
          %v1347 = vld [vmem:[#allocation2 + $0x98] sm:$0xff]
          %v1348 = vld [vmem:[#allocation2 + $0xa0] sm:$0xff]
          %v1349 = vld [vmem:[#allocation2 + $0xa8] sm:$0xff]
          %v1350 = vld [vmem:[#allocation2 + $0xb0] sm:$0xff]
          %v1351 = vld [vmem:[#allocation2 + $0xb8] sm:$0xff]
          %v1352 = vld [vmem:[#allocation2 + $0xc0] sm:$0xff]
          %v1353 = vld [vmem:[#allocation2 + $0xc8] sm:$0xff]
          %v1354 = vpack.c.bf16 %v1329, %v1328
          %v1355 = vpack.c.bf16 %v1331, %v1330
          %v1356 = vpack.c.bf16 %v1333, %v1332
          %v1357 = vpack.c.bf16 %v1335, %v1334
          %v1358 = vpack.c.bf16 %v1337, %v1336
          %v1359 = vpack.c.bf16 %v1339, %v1338
          %v1360 = vpack.c.bf16 %v1341, %v1340
          %v1361 = vpack.c.bf16 %v1343, %v1342
          %v1362 = vpack.c.bf16 %v1345, %v1344
          %v1363 = vpack.c.bf16 %v1347, %v1346
          %v1364 = vpack.c.bf16 %v1349, %v1348
          %v1365 = vpack.c.bf16 %v1351, %v1350
          %v1366 = vpack.c.bf16 %v1353, %v1352
          %v1380 = vunpack.c.l.b16 %v1354
          %v1381 = vunpack.c.h.b16 %v1354
          %v1382 = vunpack.c.l.b16 %v1355
          %v1383 = vunpack.c.h.b16 %v1355
          %v1384 = vunpack.c.l.b16 %v1356
          %v1385 = vunpack.c.h.b16 %v1356
          %v1386 = vunpack.c.l.b16 %v1357
          %v1387 = vunpack.c.h.b16 %v1357
          %v1388 = vunpack.c.l.b16 %v1358
          %v1389 = vunpack.c.h.b16 %v1358
          %v1390 = vunpack.c.l.b16 %v1359
          %v1391 = vunpack.c.h.b16 %v1359
          %v1392 = vunpack.c.l.b16 %v1360
          %v1393 = vunpack.c.h.b16 %v1360
          %v1394 = vunpack.c.l.b16 %v1361
          %v1395 = vunpack.c.h.b16 %v1361
          %v1396 = vunpack.c.l.b16 %v1362
          %v1397 = vunpack.c.h.b16 %v1362
          %v1398 = vunpack.c.l.b16 %v1363
          %v1399 = vunpack.c.h.b16 %v1363
          %v1400 = vunpack.c.l.b16 %v1364
          %v1401 = vunpack.c.h.b16 %v1364
          %v1402 = vunpack.c.l.b16 %v1365
          %v1403 = vunpack.c.h.b16 %v1365
          %v1404 = vunpack.c.l.b16 %v1366
          %v1405 = vunpack.c.h.b16 %v1366
          %v1406 = vpack.c.b16 %v1380, %v1380
          %v1407 = vpack.c.b16 %v1381, %v1381
          %v1408 = vpack.c.b16 %v1382, %v1382
          %v1409 = vpack.c.b16 %v1383, %v1383
          %v1410 = vpack.c.b16 %v1384, %v1384
          %v1411 = vpack.c.b16 %v1385, %v1385
          %v1412 = vpack.c.b16 %v1386, %v1386
          %v1413 = vpack.c.b16 %v1387, %v1387
          %v1414 = vpack.c.b16 %v1388, %v1388
          %v1415 = vpack.c.b16 %v1389, %v1389
          %v1416 = vpack.c.b16 %v1390, %v1390
          %v1417 = vpack.c.b16 %v1391, %v1391
          %v1418 = vpack.c.b16 %v1392, %v1392
          %v1419 = vpack.c.b16 %v1393, %v1393
          %v1420 = vpack.c.b16 %v1394, %v1394
          %v1421 = vpack.c.b16 %v1395, %v1395
          %v1422 = vpack.c.b16 %v1396, %v1396
          %v1423 = vpack.c.b16 %v1397, %v1397
          %v1424 = vpack.c.b16 %v1398, %v1398
          %v1425 = vpack.c.b16 %v1399, %v1399
          %v1426 = vpack.c.b16 %v1400, %v1400
          %v1427 = vpack.c.b16 %v1401, %v1401
          %v1428 = vpack.c.b16 %v1402, %v1402
          %v1429 = vpack.c.b16 %v1403, %v1403
          %v1430 = vpack.c.b16 %v1404, %v1404
          %v1431 = vpack.c.b16 %v1405, %v1405
          %1458 = vst [vmem:[#allocation11] sm:$0xf] %v1406
          %1459 = vst [vmem:[#allocation11 + $0x4] sm:$0xf] %v1407
          %1460 = vst [vmem:[#allocation11 + $0x8] sm:$0xf] %v1408
          %1461 = vst [vmem:[#allocation11 + $0xc] sm:$0xf] %v1409
          %1462 = vst [vmem:[#allocation11 + $0x10] sm:$0xf] %v1410
          %1463 = vst [vmem:[#allocation11 + $0x14] sm:$0xf] %v1411
          %1464 = vst [vmem:[#allocation11 + $0x18] sm:$0xf] %v1412
          %1465 = vst [vmem:[#allocation11 + $0x1c] sm:$0xf] %v1413
          %1466 = vst [vmem:[#allocation11 + $0x20] sm:$0xf] %v1414
          %1467 = vst [vmem:[#allocation11 + $0x24] sm:$0xf] %v1415
          %1468 = vst [vmem:[#allocation11 + $0x28] sm:$0xf] %v1416
          %1469 = vst [vmem:[#allocation11 + $0x2c] sm:$0xf] %v1417
          %1470 = vst [vmem:[#allocation11 + $0x30] sm:$0xf] %v1418
          %1471 = vst [vmem:[#allocation11 + $0x34] sm:$0xf] %v1419
          %1472 = vst [vmem:[#allocation11 + $0x38] sm:$0xf] %v1420
          %1473 = vst [vmem:[#allocation11 + $0x3c] sm:$0xf] %v1421
          %1474 = vst [vmem:[#allocation11 + $0x40] sm:$0xf] %v1422
          %1475 = vst [vmem:[#allocation11 + $0x44] sm:$0xf] %v1423
          %1476 = vst [vmem:[#allocation11 + $0x48] sm:$0xf] %v1424
          %1477 = vst [vmem:[#allocation11 + $0x4c] sm:$0xf] %v1425
          %1478 = vst [vmem:[#allocation11 + $0x50] sm:$0xf] %v1426
          %1479 = vst [vmem:[#allocation11 + $0x54] sm:$0xf] %v1427
          %1480 = vst [vmem:[#allocation11 + $0x58] sm:$0xf] %v1428
          %1481 = vst [vmem:[#allocation11 + $0x5c] sm:$0xf] %v1429
          %1482 = vst [vmem:[#allocation11 + $0x60] sm:$0xf] %v1430
          %1483 = vst [vmem:[#allocation11 + $0x64] sm:$0xf] %v1431
        $region48: #{tpu_custom_call.1} parent=27 // pred_fallthru
          _
        // Predicated region
        $region49: #{tpu_custom_call.1} parent=27 // pred_check
          %p1484 = pneg %p122
        $region50: #{tpu_custom_call.1} parent=27 // pred_check_branch
          %1486 = sbr.rel (%p1484) target = $region52
        $region51: #{tpu_custom_call.1} parent=27 // pred_region
          %s1487 = smul.u32 26, %s28
          %s1489 = ssub.s32 1664, 1664
          %1490 = vsyncadd [#allocation8], %s1489
          %s1491 = smul.addr %s1487, 64
          %s1492 = scalar_lea.hbm %s4, %s1491
          %s1493 = sshll.u32 [#allocation11], 4
          %s1494 = int_to_ptr.vmem [resolvable:$true] %s1493
          %1499 = dma.vmem_to_hbm [thread:$0]  %s1494, 1664, %s1492, [#allocation8], 64, 64, 4
        $region52: #{tpu_custom_call.1} parent=27 // pred_fallthru
          _
        // Predicated region
        $region53: #{tpu_custom_call.1} parent=27 // pred_check
          %p1500 = pneg %p122
        $region54: #{tpu_custom_call.1} parent=27 // pred_check_branch
          %1502 = sbr.rel (%p1500) target = $region56
        $region55: #{tpu_custom_call.1} parent=27 // pred_region
          %1503 = dma.done [#allocation8], 1664
        $region56: #{tpu_custom_call.1} parent=27 // pred_fallthru
          _
      $region28: #{tpu_custom_call.1} parent=5 // pred_fallthru
        _
      %p1504 = scmp.le.s32.totalorder 2, %s19
      // Predicated region
      $region57: #{tpu_custom_call.1} parent=5 // pred_check
        %p1505 = pneg %p1504
      $region58: #{tpu_custom_call.1} parent=5 // pred_check_branch
        %1507 = sbr.rel (%p1505) target = $region60
      $region59: #{tpu_custom_call.1} parent=5 // pred_region
        %s1508 = ssub.s32 %s19, 2
      $region60: #{tpu_custom_call.1} parent=5 // pred_fallthru
        _
    $region6: #{tpu_custom_call.1} parent=1 // loop_footer
      %s23 = sadd.s32 1, %s19
    $region7: #{tpu_custom_call.1} parent=1 // loop_footer_branch
      %18 = sbr.rel target = $region3
    $region8: #{tpu_custom_call.1} parent=1 // loop_exit
      _
    %1509 = vsyncpa [#allocation7], 1
    %s1510 = scalar_lea.sflag [#allocation7], 1
    %1511 = vsyncpa %s1510, 1
    %1512 = vsyncpa [#allocation10], 1
    %s1513 = scalar_lea.sflag [#allocation10], 1
    %1514 = vsyncpa %s1513, 1
    %1515 = vsyncpa [#allocation8], 1
    %s1516 = scalar_lea.sflag [#allocation8], 1
    %1517 = vsyncpa %s1516, 1

</llo_original>
